<compile_context>
chip_gen: v7x
topology: tpu7x:2x2x1
jax: 0.10.0
libtpu: 0.0.40
codegen_flags: <defaults>
</compile_context>

<pallas_src>
import functools

import jax
import jax.numpy as jnp
from jax import lax
from jax.experimental import pallas as pl
from jax.experimental.pallas import tpu as pltpu

LN_EPS = 1e-5
NEG_BIG = -1e30


def _round_up(x, m):
    return (x + m - 1) // m * m


# ---------------------------------------------------------------------------
# In-kernel helpers (operate on traced jnp values, all 2-D)
# ---------------------------------------------------------------------------
def _layernorm(x, w, b):
    mu = jnp.mean(x, axis=-1, keepdims=True)
    var = jnp.mean((x - mu) ** 2, axis=-1, keepdims=True)
    return (x - mu) * lax.rsqrt(var + LN_EPS) * w + b


def _lstm_cell_fused(x, h, c, w_xh, b):
    """PyTorch nn.LSTMCell (gate order i,f,g,o) with fused [x;h] matmul."""
    xh = jnp.concatenate([x, h], axis=-1)
    gates = jnp.dot(xh, w_xh, preferred_element_type=jnp.float32) + b
    hs = h.shape[-1]
    i = jax.nn.sigmoid(gates[:, 0 * hs:1 * hs])
    f = jax.nn.sigmoid(gates[:, 1 * hs:2 * hs])
    g = jnp.tanh(gates[:, 2 * hs:3 * hs])
    o = jax.nn.sigmoid(gates[:, 3 * hs:4 * hs])
    c_new = f * c + i * g
    h_new = o * jnp.tanh(c_new)
    return h_new, c_new


def _argmax_first(x):
    """First argmax along last dim, returned with keepdims -> (B, 1) int32."""
    v = x.shape[-1]
    maxv = jnp.max(x, axis=-1, keepdims=True)
    col = lax.broadcasted_iota(jnp.int32, x.shape, 1)
    return jnp.min(jnp.where(x >= maxv, col, v), axis=-1, keepdims=True)


# ---------------------------------------------------------------------------
# Stage 1: features = relu(fc1(x)) -- K-streamed GEMM (bf16 inputs, f32 acc)
# ---------------------------------------------------------------------------
def fc1_kernel(x_ref, w_ref, b_ref, o_ref, acc_ref):
    @pl.when(pl.program_id(0) == 0)
    def _():
        acc_ref[...] = jnp.zeros_like(acc_ref)

    acc_ref[...] += jnp.dot(x_ref[...], w_ref[...],
                            preferred_element_type=jnp.float32)

    @pl.when(pl.program_id(0) == pl.num_programs(0) - 1)
    def _():
        o_ref[...] = jnp.maximum(acc_ref[...] + b_ref[...], 0.0)


def fc1_forward(x_bf16, w_bf16, b, *, block_k=2048):
    bp, k = x_bf16.shape
    h = w_bf16.shape[1]
    kp = _round_up(k, block_k)
    if kp != k:  # zero-pad the reduction dim (exact; contributes 0)
        x_bf16 = jnp.zeros((bp, kp), x_bf16.dtype).at[:, :k].set(x_bf16)
        w_bf16 = jnp.zeros((kp, h), w_bf16.dtype).at[:k].set(w_bf16)
    grid_k = kp // block_k
    return pl.pallas_call(
        fc1_kernel,
        out_shape=jax.ShapeDtypeStruct((bp, h), jnp.float32),
        grid_spec=pltpu.PrefetchScalarGridSpec(
            num_scalar_prefetch=0,
            grid=(grid_k,),
            in_specs=[pl.BlockSpec((bp, block_k), lambda kk: (0, kk)),
                      pl.BlockSpec((block_k, h), lambda kk: (kk, 0)),
                      pl.BlockSpec((1, h), lambda kk: (0, 0))],
            out_specs=pl.BlockSpec((bp, h), lambda kk: (0, 0)),
            scratch_shapes=[pltpu.VMEM((bp, h), jnp.float32)]),
        compiler_params=pltpu.CompilerParams(
            dimension_semantics=("arbitrary",)),
    )(x_bf16, w_bf16, b)


# ---------------------------------------------------------------------------
# Stage 2: recurrent decode kernel (grid-less, everything resident in VMEM)
# ---------------------------------------------------------------------------
def decoder_kernel(feat_ref,
                   init_w_ref, init_b_ref,
                   lnh_w_ref, lnh_b_ref, lnc_w_ref, lnc_b_ref,
                   l1_w_ref, l1_b_ref, l2_w_ref, l2_b_ref,
                   fc_w_ref, fc_b_ref, emtok_w_ref,
                   out_ref, *, max_length, hidden, embed):
    feat = feat_ref[...]                       # (Bp, H) f32 == relu(fc1(x))
    batch = feat.shape[0]
    vpad = fc_b_ref.shape[-1]
    H = hidden

    # h = ln_h(relu(init_h(feat)));  c = ln_c(relu(init_c(feat)))  (fused GEMM)
    hc = jnp.maximum(
        jnp.dot(feat, init_w_ref[...], preferred_element_type=jnp.float32)
        + init_b_ref[...], 0.0)
    h = _layernorm(hc[:, :H], lnh_w_ref[...], lnh_b_ref[...])
    c = _layernorm(hc[:, H:2 * H], lnc_w_ref[...], lnc_b_ref[...])

    h1, c1 = _lstm_cell_fused(feat, h, c, l1_w_ref[...], l1_b_ref[...])
    h2, c2 = _lstm_cell_fused(h1, h, c, l2_w_ref[...], l2_b_ref[...])
    h3, c3 = _lstm_cell_fused(h2, h, c, l2_w_ref[...], l2_b_ref[...])

    def predict(h3_):
        pred = (jnp.dot(h3_, fc_w_ref[...], preferred_element_type=jnp.float32)
                + fc_b_ref[...])                                  # (Bp, Vpad)
        idx = _argmax_first(pred)                                 # (Bp, 1)
        col = lax.broadcasted_iota(jnp.int32, (batch, vpad), 1)
        onehot = (col == idx).astype(jnp.float32)                 # (Bp, Vpad)
        # fused gather: [embed | totoken] in one MXU matmul
        emtok = jnp.dot(onehot, emtok_w_ref[...],
                        preferred_element_type=jnp.float32)       # (Bp, Epad)
        word = emtok[:, :embed]                                   # (Bp, E)
        tok0 = emtok[0:1, embed:embed + 1]                        # (1, 1)
        return word, tok0

    word, tok0 = predict(h3)
    out_ref[:, 0:1] = jnp.broadcast_to(tok0, (batch, 1))

    # Fully unrolled recurrent loop (static trip count) so the scheduler can
    # overlap the step-t epilogue (argmax / one-hot / store) with step-(t+1)
    # matmul issue.  Weight refs are indexed at point of use.
    for t in range(1, max_length):
        h1, c1 = _lstm_cell_fused(
            word,
            _layernorm(h1, lnh_w_ref[...], lnh_b_ref[...]) + h,
            _layernorm(c1, lnc_w_ref[...], lnc_b_ref[...]) + c,
            l1_w_ref[...], l1_b_ref[...])
        h2, c2 = _lstm_cell_fused(h1, h2, c2, l2_w_ref[...], l2_b_ref[...])
        h3, c3 = _lstm_cell_fused(h2, h3, c3, l2_w_ref[...], l2_b_ref[...])
        word, tok0 = predict(h3)
        out_ref[:, t:t + 1] = jnp.broadcast_to(tok0, (batch, 1))


# ---------------------------------------------------------------------------
# Wrapper: param fusion / padding + the two pallas_calls.
# ---------------------------------------------------------------------------
def _prepare_recurrent_params(p, *, vpad, epad):
    H = p["lnh_w"].shape[-1]
    E = p["embed_w"].shape[-1]
    V = p["embed_w"].shape[0]
    init_w = jnp.concatenate([p["ih_wt"], p["ic_wt"]], axis=1)      # (H, 2H)
    init_b = jnp.concatenate([p["ih_b"], p["ic_b"]], axis=1)        # (1, 2H)
    l1_w = jnp.concatenate([p["l1_wih"], p["l1_whh"]], axis=0)      # (E+H, 4H)
    l2_w = jnp.concatenate([p["l2_wih"], p["l2_whh"]], axis=0)      # (2H, 4H)
    # vocab padded to a 128-lane tile; padded logits pinned to -1e30
    fc_w = jnp.zeros((H, vpad), jnp.float32).at[:, :V].set(p["fc_wt"])
    fc_b = jnp.full((1, vpad), NEG_BIG, jnp.float32).at[:, :V].set(p["fc_b"])
    # fused [embed | totoken] gather table, lane-padded
    emtok = jnp.zeros((vpad, epad), jnp.float32)
    emtok = emtok.at[:V, :E].set(p["embed_w"])
    emtok = emtok.at[:V, E].set(p["totoken_w"][:, 0])
    return dict(init_w=init_w, init_b=init_b,
                lnh_w=p["lnh_w"], lnh_b=p["lnh_b"],
                lnc_w=p["lnc_w"], lnc_b=p["lnc_b"],
                l1_w=l1_w, l1_b=p["l1_b"], l2_w=l2_w, l2_b=p["l2_b"],
                fc_w=fc_w, fc_b=fc_b, emtok=emtok)


def decoder_rnn_forward(features, params, max_length=15):
    B, feat_dim = features.shape
    H = params["lnh_w"].shape[-1]
    E = params["embed_w"].shape[-1]
    V = params["embed_w"].shape[0]
    Bp = max(_round_up(B, 8), 8)            # f32 sublane alignment
    vpad = _round_up(V, 128)
    epad = _round_up(E + 1, 128)

    # ---- stage 1: features = relu(fc1(x)), K-streamed, bf16 weights --------
    x = jnp.zeros((Bp, feat_dim), features.dtype).at[:B].set(features)
    feat = fc1_forward(x.astype(jnp.bfloat16),
                       params["fc1_wt"].astype(jnp.bfloat16),
                       params["fc1_b"])

    # ---- stage 2: recurrent decode ------------------------------------------
    # NOTE: at larger batch, add a batch-tile grid axis with
    # dimension_semantics=("parallel",) to use both v7x TensorCores; with a
    # single (8-row) tile a grid would be pure overhead.
    kp = _prepare_recurrent_params(params, vpad=vpad, epad=epad)
    order = ("init_w", "init_b", "lnh_w", "lnh_b", "lnc_w", "lnc_b",
             "l1_w", "l1_b", "l2_w", "l2_b", "fc_w", "fc_b", "emtok")
    inputs = (feat,) + tuple(kp[k] for k in order)
    vmem = pl.BlockSpec(memory_space=pltpu.MemorySpace.VMEM)
    out = pl.pallas_call(
        functools.partial(decoder_kernel, max_length=max_length,
                          hidden=H, embed=E),
        out_shape=jax.ShapeDtypeStruct((Bp, max_length), jnp.float32),
        in_specs=[vmem] * len(inputs),
        out_specs=vmem,
    )(*inputs)
    return out[:B]


# ---------------------------------------------------------------------------
# Deterministic parameter init (shapes from the module's __init__).
# ---------------------------------------------------------------------------
def init_params(key, *, embed_size, hidden_size, vocab_size, encoder_dim,
                feat_dim):
    ks = iter(jax.random.split(key, 16))

    def linear(fan_in, fan_out):
        k = next(ks)
        k1, k2 = jax.random.split(k)
        bound = 1.0 / (fan_in ** 0.5)
        w = jax.random.uniform(k1, (fan_out, fan_in), jnp.float32, -bound, bound)
        b = jax.random.uniform(k2, (fan_out,), jnp.float32, -bound, bound)
        return w.T, b.reshape(1, fan_out)

    def lstm(input_size, hs):
        kk = jax.random.split(next(ks), 4)
        bound = 1.0 / (hs ** 0.5)
        w_ih = jax.random.uniform(kk[0], (4 * hs, input_size), jnp.float32, -bound, bound)
        w_hh = jax.random.uniform(kk[1], (4 * hs, hs), jnp.float32, -bound, bound)
        b_ih = jax.random.uniform(kk[2], (4 * hs,), jnp.float32, -bound, bound)
        b_hh = jax.random.uniform(kk[3], (4 * hs,), jnp.float32, -bound, bound)
        return w_ih.T, w_hh.T, (b_ih + b_hh).reshape(1, 4 * hs)

    H = hidden_size
    p = {}
    p["fc1_wt"], p["fc1_b"] = linear(feat_dim, H)
    p["ih_wt"], p["ih_b"] = linear(encoder_dim, H)
    p["ic_wt"], p["ic_b"] = linear(encoder_dim, H)
    p["lnh_w"] = jnp.ones((1, H), jnp.float32)
    p["lnh_b"] = jnp.zeros((1, H), jnp.float32)
    p["lnc_w"] = jnp.ones((1, H), jnp.float32)
    p["lnc_b"] = jnp.zeros((1, H), jnp.float32)
    p["l1_wih"], p["l1_whh"], p["l1_b"] = lstm(embed_size, H)
    p["l2_wih"], p["l2_whh"], p["l2_b"] = lstm(H, H)
    p["fc_wt"], p["fc_b"] = linear(H, vocab_size)
    p["embed_w"] = jax.random.normal(next(ks), (vocab_size, embed_size),
                                     jnp.float32)
    # totoken = Embedding.from_pretrained(weight), weight: (vocab, 1)
    p["totoken_w"] = jnp.arange(vocab_size, dtype=jnp.float32).reshape(vocab_size, 1)
    return p


# ---------------------------------------------------------------------------
# Pure-JAX reference (same math, no Pallas) used for a correctness check.
# Mirrors the bf16 cast of the fc1 weight/activations.
# ---------------------------------------------------------------------------
def _lstm_cell_ref(x, h, c, w_ih_t, w_hh_t, b):
    gates = (jnp.dot(x, w_ih_t, preferred_element_type=jnp.float32)
             + jnp.dot(h, w_hh_t, preferred_element_type=jnp.float32) + b)
    hs = h.shape[-1]
    i = jax.nn.sigmoid(gates[:, 0 * hs:1 * hs])
    f = jax.nn.sigmoid(gates[:, 1 * hs:2 * hs])
    g = jnp.tanh(gates[:, 2 * hs:3 * hs])
    o = jax.nn.sigmoid(gates[:, 3 * hs:4 * hs])
    c_new = f * c + i * g
    h_new = o * jnp.tanh(c_new)
    return h_new, c_new


def decoder_rnn_reference(features, p, max_length=15):
    def lin(x, wt, b):
        return x @ wt + b

    feat = jnp.maximum(
        jnp.dot(features.astype(jnp.bfloat16),
                p["fc1_wt"].astype(jnp.bfloat16),
                preferred_element_type=jnp.float32) + p["fc1_b"], 0.0)
    h = _layernorm(jnp.maximum(lin(feat, p["ih_wt"], p["ih_b"]), 0.0),
                   p["lnh_w"], p["lnh_b"])
    c = _layernorm(jnp.maximum(lin(feat, p["ic_wt"], p["ic_b"]), 0.0),
                   p["lnc_w"], p["lnc_b"])
    h1, c1 = _lstm_cell_ref(feat, h, c, p["l1_wih"], p["l1_whh"], p["l1_b"])
    h2, c2 = _lstm_cell_ref(h1, h, c, p["l2_wih"], p["l2_whh"], p["l2_b"])
    h3, c3 = _lstm_cell_ref(h2, h, c, p["l2_wih"], p["l2_whh"], p["l2_b"])

    def predict(h3_):
        pred = lin(h3_, p["fc_wt"], p["fc_b"])
        idx = jnp.argmax(pred, axis=-1)
        word = p["embed_w"][idx]
        tok0 = p["totoken_w"][idx][0, 0]
        return word, tok0

    B = features.shape[0]
    word, tok0 = predict(h3)
    caption = jnp.zeros((B, max_length), jnp.float32).at[:, 0].set(tok0)
    for t in range(1, max_length):
        h1, c1 = _lstm_cell_ref(word,
                                _layernorm(h1, p["lnh_w"], p["lnh_b"]) + h,
                                _layernorm(c1, p["lnc_w"], p["lnc_b"]) + c,
                                p["l1_wih"], p["l1_whh"], p["l1_b"])
        h2, c2 = _lstm_cell_ref(h1, h2, c2, p["l2_wih"], p["l2_whh"], p["l2_b"])
        h3, c3 = _lstm_cell_ref(h2, h3, c3, p["l2_wih"], p["l2_whh"], p["l2_b"])
        word, tok0 = predict(h3)
        caption = caption.at[:, t].set(tok0)
    return caption


if __name__ == "__main__":
    # embed == hidden == encoder_dim is required by the module's forward;
    # 128 keeps every gate slice / recurrent matmul lane-aligned.
    BATCH = 2
    HIDDEN = 128
    EMBED = 128
    ENCODER_DIM = 128
    VOCAB = 50              # padded to 128 inside the wrapper
    FEAT_DIM = 2048 * 3 * 3  # hard-coded fc1 input dim in the module
    MAX_LENGTH = 15

    root = jax.random.PRNGKey(0)
    k_feat, k_params = jax.random.split(root)
    features = jax.random.normal(k_feat, (BATCH, FEAT_DIM), jnp.float32) * 0.1
    params = init_params(k_params, embed_size=EMBED, hidden_size=HIDDEN,
                         vocab_size=VOCAB, encoder_dim=ENCODER_DIM,
                         feat_dim=FEAT_DIM)

    out = decoder_rnn_forward(features, params, max_length=MAX_LENGTH)
    out = jax.block_until_ready(out)

    ref = decoder_rnn_reference(features, params, max_length=MAX_LENGTH)
    ref = jax.block_until_ready(ref)

    assert out.shape == (BATCH, MAX_LENGTH)
    assert bool(jnp.all(jnp.isfinite(out)))
    assert bool(jnp.allclose(out, ref, atol=1e-4)), (out, ref)
    print("KERNEL_OK")
</pallas_src>

<mosaic_0001>
module attributes {stable_mosaic.version = 11 : i64} {
  func.func @fc1_kernel(%arg0: i32, %arg1: memref<8x2048xbf16, #tpu.memory_space<vmem>>, %arg2: memref<2048x128xbf16, #tpu.memory_space<vmem>>, %arg3: memref<1x128xf32, #tpu.memory_space<vmem>>, %arg4: memref<8x128xf32, #tpu.memory_space<vmem>>, %arg5: memref<8x128xf32, #tpu.memory_space<vmem>>) attributes {dimension_semantics = [#tpu.dimension_semantics<arbitrary>], iteration_bounds = array<i64: 9>, scalar_prefetch = 0 : i64, scratch_operands = 1 : i64, tpu.core_type = #tpu.core_type<tc>, window_params = [{transform_indices = @transform_0, window_bounds = array<i64: 8, 2048>}, {transform_indices = @transform_1, window_bounds = array<i64: 2048, 128>}, {pipeline_mode = #tpu.pipeline_mode<synchronous>, transform_indices = @transform_2, window_bounds = array<i64: 1, 128>}, {pipeline_mode = #tpu.pipeline_mode<synchronous>, transform_indices = @transform_3, window_bounds = array<i64: 8, 128>}]} {
    %c0_i32 = arith.constant 0 : i32
    %0 = arith.cmpi eq, %arg0, %c0_i32 : i32
    %1 = arith.extui %0 : i1 to i32
    %c0_i32_0 = arith.constant 0 : i32
    %2 = arith.cmpi ne, %1, %c0_i32_0 : i32
    scf.if %2 {
      %cst_9 = arith.constant 0.000000e+00 : f32
      %12 = vector.broadcast %cst_9 : f32 to vector<8x128xf32>
      %c0_10 = arith.constant 0 : index
      %c0_11 = arith.constant 0 : index
      %13 = vector.load %arg5[%c0_10, %c0_11] : memref<8x128xf32, #tpu.memory_space<vmem>>, vector<8x128xf32>
      tpu.vector_store %arg5[%c0_10, %c0_11], %12 {strides = array<i32>} : memref<8x128xf32, #tpu.memory_space<vmem>>, vector<8x128xf32>,
    } else {
    }
    %c0 = arith.constant 0 : index
    %c0_1 = arith.constant 0 : index
    %3 = vector.load %arg5[%c0, %c0_1] : memref<8x128xf32, #tpu.memory_space<vmem>>, vector<8x128xf32>
    %c0_2 = arith.constant 0 : index
    %c0_3 = arith.constant 0 : index
    %4 = vector.load %arg1[%c0_2, %c0_3] : memref<8x2048xbf16, #tpu.memory_space<vmem>>, vector<8x2048xbf16>
    %c0_4 = arith.constant 0 : index
    %c0_5 = arith.constant 0 : index
    %5 = vector.load %arg2[%c0_4, %c0_5] : memref<2048x128xbf16, #tpu.memory_space<vmem>>, vector<2048x128xbf16>
    %cst = arith.constant dense<0.000000e+00> : vector<8x128xf32>
    %6 = tpu.matmul %4, %5, %cst {dimension_numbers = #tpu.dot_dimension_numbers<[1], [0], [0], [1], [0, 0, 1, 1], [], []>} : vector<8x2048xbf16>, vector<2048x128xbf16>, vector<8x128xf32> -> vector<8x128xf32>
    %7 = arith.addf %3, %6 : vector<8x128xf32>
    %c0_6 = arith.constant 0 : index
    %c0_7 = arith.constant 0 : index
    %8 = vector.load %arg5[%c0_6, %c0_7] : memref<8x128xf32, #tpu.memory_space<vmem>>, vector<8x128xf32>
    tpu.vector_store %arg5[%c0_6, %c0_7], %7 {strides = array<i32>} : memref<8x128xf32, #tpu.memory_space<vmem>>, vector<8x128xf32>,
    %c8_i32 = arith.constant 8 : i32
    %9 = arith.cmpi eq, %arg0, %c8_i32 : i32
    %10 = arith.extui %9 : i1 to i32
    %c0_i32_8 = arith.constant 0 : i32
    %11 = arith.cmpi ne, %10, %c0_i32_8 : i32
    scf.if %11 {
      %c0_9 = arith.constant 0 : index
      %c0_10 = arith.constant 0 : index
      %12 = vector.load %arg5[%c0_9, %c0_10] : memref<8x128xf32, #tpu.memory_space<vmem>>, vector<8x128xf32>
      %c0_11 = arith.constant 0 : index
      %c0_12 = arith.constant 0 : index
      %13 = vector.load %arg3[%c0_11, %c0_12] : memref<1x128xf32, #tpu.memory_space<vmem>>, vector<1x128xf32>
      %14 = vector.broadcast %13 : vector<1x128xf32> to vector<8x128xf32>
      %15 = arith.addf %12, %14 : vector<8x128xf32>
      %cst_13 = arith.constant 0.000000e+00 : f32
      %16 = vector.broadcast %cst_13 : f32 to vector<8x128xf32>
      %17 = arith.maximumf %15, %16 : vector<8x128xf32>
      %c0_14 = arith.constant 0 : index
      %c0_15 = arith.constant 0 : index
      %18 = vector.load %arg4[%c0_14, %c0_15] : memref<8x128xf32, #tpu.memory_space<vmem>>, vector<8x128xf32>
      tpu.vector_store %arg4[%c0_14, %c0_15], %17 {strides = array<i32>} : memref<8x128xf32, #tpu.memory_space<vmem>>, vector<8x128xf32>,
    } else {
    }
    return
  }
  func.func @transform_0(%arg0: i32) -> (i32, i32) {
    %c0_i32 = arith.constant 0 : i32
    %c0_i32_0 = arith.constant 0 : i32
    return %c0_i32, %arg0 : i32, i32
  }
  func.func @transform_1(%arg0: i32) -> (i32, i32) {
    %c0_i32 = arith.constant 0 : i32
    %c0_i32_0 = arith.constant 0 : i32
    return %arg0, %c0_i32 : i32, i32
  }
  func.func @transform_2(%arg0: i32) -> (i32, i32) {
    %c0_i32 = arith.constant 0 : i32
    %c0_i32_0 = arith.constant 0 : i32
    %c0_i32_1 = arith.constant 0 : i32
    return %c0_i32, %c0_i32_0 : i32, i32
  }
  func.func @transform_3(%arg0: i32) -> (i32, i32) {
    %c0_i32 = arith.constant 0 : i32
    %c0_i32_0 = arith.constant 0 : i32
    %c0_i32_1 = arith.constant 0 : i32
    return %c0_i32, %c0_i32_0 : i32, i32
  }
}

</mosaic_0001>

<llo_original>
// kernel: tpu_custom_call.1
$region0: #{tpu_custom_call.1}
  #allocation0 [shape = 'u32[]', space=smem, size = 0x4, offset = 0x4, fixed_abs, tag = 'smem constant byte address 0x4 - core index']
  #allocation1 [shape = 'u32[144,128]{1,0:T(1,128)}', space=vmem, size = 0x12000, scoped, tag = 'internal scratch']
  #allocation2 [shape = 'f32[8,128]{1,0:T(8,128)}', space=vmem, size = 0x1000, scoped, tag = 'scratch operand']
  %s0 = inlined_call_operand.hbm [shape: bf16[8,18432], index: 0, kind: input, shape index: {}]
  %s1 = inlined_call_operand.hbm [shape: bf16[18432,128], index: 1, kind: input, shape index: {}]
  %s2 = inlined_call_operand.hbm [shape: f32[1,128], index: 2, kind: input, shape index: {}]
  %s3 = inlined_call_operand.hbm [shape: f32[8,128], index: 3, kind: output, shape index: {}]
  %s4 = sld [smem:[#allocation0]]
  $region65: #{tpu_custom_call.1} parent=0
    _
  %s6 = ssub.s32 1, %s4
  %s7 = scalar_select 0, %s6, %s4
  $region1: #{tpu_custom_call.1} parent=0
    #allocation3 [shape = 'u8[65536]{0}', space=vmem, size = 0x10000, scoped, tag = 'input window, operand 0']
    #allocation4 [shape = 's32[2]{0}', space=sflag, size = 0x8, scoped, tag = 'scoped memory for tpu_custom_call.1']
    #allocation5 [shape = 's32[2]{0}', space=sflag, size = 0x8, scoped, tag = 'scoped memory for tpu_custom_call.1']
    #allocation6 [shape = 'u8[1048576]{0}', space=vmem, size = 0x100000, scoped, tag = 'input window, operand 1']
    #allocation7 [shape = 's32[2]{0}', space=sflag, size = 0x8, scoped, tag = 'scoped memory for tpu_custom_call.1']
    #allocation8 [shape = 'u8[512]{0}', space=vmem, size = 0x400, scoped, tag = 'input window, operand 2, single buffered']
    #allocation9 [shape = 'u8[4096]{0}', space=vmem, size = 0x1000, scoped, tag = 'output window, operand 0, single buffered']
    %8 = vsyncpa [#allocation4], 0
    %s9 = scalar_lea.sflag [#allocation4], 1
    %10 = vsyncpa %s9, 0
    %11 = vsyncpa [#allocation7], 0
    %s12 = scalar_lea.sflag [#allocation7], 1
    %13 = vsyncpa %s12, 0
    %14 = vsyncpa [#allocation5], 0
    loop: start=0, step=1, limit=11
    $region2: #{tpu_custom_call.1} parent=1 // loop_pre_header
      _
    $region3: #{tpu_custom_call.1} parent=1 // loop_header
      %s16 = sphi 0, %s20
      %p17 = scmp.ge.s32.totalorder %s16, 11
      %s26 = sphi 0, %s28
      %s29 = sphi 0, %s26
      %s30 = sphi 0, %s29
      %s46 = sphi 0, %s30
      %s52 = sphi 0, %s54
      %s55 = sphi 0, %s52
      %s56 = sphi 0, %s55
      %s72 = sphi 0, %s56
      %s76 = sphi 0, %s76
      %s78 = sphi 0, %s76
      %s79 = sphi 0, %s78
      %s93 = sphi 0, %s79
      %s97 = sphi 0, %s97
      %s99 = sphi 0, %s97
      %s100 = sphi 0, %s99
      %s114 = sphi 0, %s100
    $region4: #{tpu_custom_call.1} parent=1 // loop_header_branch
      %19 = sbr.rel (%p17) target = $region8
    $region5: #{tpu_custom_call.1} parent=1 // loop_body
      %s21 = ssub.s32 %s16, 1
      %s22 = ssub.s32 %s16, 2
      %s23 = sadd.s32 %s16, 1
      %s24 = ssub.s32 %s16, %s23
      %p25 = scmp.eq.s32.totalorder %s24, 0
      %s27 = sadd.s32 %s26, 1
      %s28 = scalar_select %p25, %s26, %s27
      %p31 = pneg %p25
      %p32 = scmp.eq.s32.totalorder %s16, 8
      %p33 = por %p31, %p32
      %p34 = scmp.ne.s32.totalorder %s26, %s29
      %p35 = scmp.eq.s32.totalorder %s16, 0
      %p36 = por %p34, %p35
      %p37 = scmp.ne.s32.totalorder %s26, %s29
      %p38 = scmp.eq.s32.totalorder %s21, 8
      %p39 = por %p37, %p38
      %p40 = scmp.ne.s32.totalorder %s29, %s30
      %p41 = scmp.eq.s32.totalorder %s21, 0
      %p42 = por %p40, %p41
      %p43 = scmp.ne.s32.totalorder %s29, %s30
      %p44 = scmp.eq.s32.totalorder %s22, 8
      %p45 = por %p43, %p44
      %p47 = scmp.ne.s32.totalorder %s30, %s46
      %p48 = scmp.eq.s32.totalorder %s22, 0
      %p49 = por %p47, %p48
      %s50 = ssub.s32 %s16, %s23
      %p51 = scmp.eq.s32.totalorder %s50, 0
      %s53 = sadd.s32 %s52, 1
      %s54 = scalar_select %p51, %s52, %s53
      %p57 = pneg %p51
      %p58 = scmp.eq.s32.totalorder %s16, 8
      %p59 = por %p57, %p58
      %p60 = scmp.ne.s32.totalorder %s52, %s55
      %p61 = scmp.eq.s32.totalorder %s16, 0
      %p62 = por %p60, %p61
      %p63 = scmp.ne.s32.totalorder %s52, %s55
      %p64 = scmp.eq.s32.totalorder %s21, 8
      %p65 = por %p63, %p64
      %p66 = scmp.ne.s32.totalorder %s55, %s56
      %p67 = scmp.eq.s32.totalorder %s21, 0
      %p68 = por %p66, %p67
      %p69 = scmp.ne.s32.totalorder %s55, %s56
      %p70 = scmp.eq.s32.totalorder %s22, 8
      %p71 = por %p69, %p70
      %p73 = scmp.ne.s32.totalorder %s56, %s72
      %p74 = scmp.eq.s32.totalorder %s22, 0
      %p75 = por %p73, %p74
      %s77 = sadd.s32 %s76, 1
      %p80 = scmp.eq.s32.totalorder %s16, 8
      %p81 = scmp.ne.s32.totalorder %s76, %s78
      %p82 = scmp.eq.s32.totalorder %s16, 0
      %p83 = por %p81, %p82
      %p84 = scmp.ne.s32.totalorder %s76, %s78
      %p85 = scmp.eq.s32.totalorder %s21, 8
      %p86 = por %p84, %p85
      %p87 = scmp.ne.s32.totalorder %s78, %s79
      %p88 = scmp.eq.s32.totalorder %s21, 0
      %p89 = por %p87, %p88
      %p90 = scmp.ne.s32.totalorder %s78, %s79
      %p91 = scmp.eq.s32.totalorder %s22, 8
      %p92 = por %p90, %p91
      %p94 = scmp.ne.s32.totalorder %s79, %s93
      %p95 = scmp.eq.s32.totalorder %s22, 0
      %p96 = por %p94, %p95
      %s98 = sadd.s32 %s97, 1
      %p101 = scmp.eq.s32.totalorder %s16, 8
      %p102 = scmp.ne.s32.totalorder %s97, %s99
      %p103 = scmp.eq.s32.totalorder %s16, 0
      %p104 = por %p102, %p103
      %p105 = scmp.ne.s32.totalorder %s97, %s99
      %p106 = scmp.eq.s32.totalorder %s21, 8
      %p107 = por %p105, %p106
      %p108 = scmp.ne.s32.totalorder %s99, %s100
      %p109 = scmp.eq.s32.totalorder %s21, 0
      %p110 = por %p108, %p109
      %p111 = scmp.ne.s32.totalorder %s99, %s100
      %p112 = scmp.eq.s32.totalorder %s22, 8
      %p113 = por %p111, %p112
      %p115 = scmp.ne.s32.totalorder %s100, %s114
      %p116 = scmp.eq.s32.totalorder %s22, 0
      %p117 = por %p115, %p116
      %p118 = scmp.le.s32.totalorder 1, %s16
      %p119 = scmp.lt.s32.totalorder %s16, 10
      %p120 = pnand %p118, %p119
      %p121 = pneg %p120
      // Predicated region
      $region9: #{tpu_custom_call.1} parent=5 // pred_check
        _
      $region10: #{tpu_custom_call.1} parent=5 // pred_check_branch
        %123 = sbr.rel (%p120) target = $region12
      $region11: #{tpu_custom_call.1} parent=5 // pred_region
        %s124 = ssub.s32 %s16, 1
        // Predicated region
        $region13: #{tpu_custom_call.1} parent=11 // pred_check
          %p125 = pneg %p89
        $region14: #{tpu_custom_call.1} parent=11 // pred_check_branch
          %127 = sbr.rel (%p125) target = $region16
        $region15: #{tpu_custom_call.1} parent=11 // pred_region
          %s129 = ssub.s32 16, 16
          %130 = vsyncadd [#allocation7], %s129
          %s132 = sshll.u32 [#allocation8], 4
          %s133 = int_to_ptr.vmem [resolvable:$true] %s132
          %135 = dma.hbm_to_vmem [thread:$0]  %s2, 16, %s133, [#allocation7]
        $region16: #{tpu_custom_call.1} parent=11 // pred_fallthru
          _
      $region12: #{tpu_custom_call.1} parent=5 // pred_fallthru
        _
      %p136 = scmp.lt.s32.totalorder %s16, 9
      // Predicated region
      $region17: #{tpu_custom_call.1} parent=5 // pred_check
        %p137 = pneg %p136
      $region18: #{tpu_custom_call.1} parent=5 // pred_check_branch
        %139 = sbr.rel (%p137) target = $region20
      $region19: #{tpu_custom_call.1} parent=5 // pred_region
        // Predicated region
        $region21: #{tpu_custom_call.1} parent=19 // pred_check
          %p140 = pneg %p36
        $region22: #{tpu_custom_call.1} parent=19 // pred_check_branch
          %142 = sbr.rel (%p140) target = $region24
        $region23: #{tpu_custom_call.1} parent=19 // pred_region
          %s143 = sand.u32 %s26, 1
          %s144 = scalar_lea.sflag [#allocation4], %s143
          %s145 = sand.u32 %s26, 1
          %s146 = smul.addr %s145, 64
          %s147 = scalar_lea.vmem [#allocation3], %s146
          %s148 = smul.u32 16, %s16
          %s150 = ssub.s32 1024, 1024
          %151 = vsyncadd %s144, %s150
          %s152 = smul.addr %s148, 64
          %s153 = scalar_lea.hbm %s0, %s152
          %s155 = sshll.u32 %s147, 4
          %s156 = int_to_ptr.vmem [resolvable:$true] %s155
          %158 = dma.hbm_to_vmem [thread:$0]  %s153, 1024, %s156, %s144
        $region24: #{tpu_custom_call.1} parent=19 // pred_fallthru
          _
        // Predicated region
        $region25: #{tpu_custom_call.1} parent=19 // pred_check
          %p159 = pneg %p62
        $region26: #{tpu_custom_call.1} parent=19 // pred_check_branch
          %161 = sbr.rel (%p159) target = $region28
        $region27: #{tpu_custom_call.1} parent=19 // pred_region
          %s162 = sand.u32 %s16, 1
          %s163 = scalar_lea.sflag [#allocation7], %s162
          %s164 = sand.u32 %s52, 1
          %s165 = smul.addr %s164, 1024
          %s166 = scalar_lea.vmem [#allocation6], %s165
          %s167 = smul.u32 256, %s16
          %s169 = ssub.s32 16384, 16384
          %170 = vsyncadd %s163, %s169
          %s171 = smul.addr %s167, 64
          %s172 = scalar_lea.hbm %s1, %s171
          %s173 = sshll.u32 %s166, 4
          %s174 = int_to_ptr.vmem [resolvable:$true] %s173
          %179 = dma.hbm_to_vmem [thread:$0]  %s172, 16384, %s174, %s163, 64, 64, 4
        $region28: #{tpu_custom_call.1} parent=19 // pred_fallthru
          _
      $region20: #{tpu_custom_call.1} parent=5 // pred_fallthru
        _
      %p180 = scmp.le.s32.totalorder 1, %s16
      %p181 = scmp.lt.s32.totalorder %s16, 10
      %p182 = pnand %p180, %p181
      %p183 = pneg %p182
      // Predicated region
      $region29: #{tpu_custom_call.1} parent=5 // pred_check
        _
      $region30: #{tpu_custom_call.1} parent=5 // pred_check_branch
        %185 = sbr.rel (%p182) target = $region32
      $region31: #{tpu_custom_call.1} parent=5 // pred_region
        %s186 = ssub.s32 %s16, 1
        %s187 = sand.u32 %s29, 1
        %s188 = scalar_lea.sflag [#allocation4], %s187
        %s189 = sand.u32 %s29, 1
        %s190 = smul.addr %s189, 64
        %s191 = scalar_lea.vmem [#allocation3], %s190
        // Predicated region
        $region33: #{tpu_custom_call.1} parent=31 // pred_check
          %p192 = pneg %p42
        $region34: #{tpu_custom_call.1} parent=31 // pred_check_branch
          %194 = sbr.rel (%p192) target = $region36
        $region35: #{tpu_custom_call.1} parent=31 // pred_region
          %195 = dma.done %s188, 1024
        $region36: #{tpu_custom_call.1} parent=31 // pred_fallthru
          _
        %s196 = sand.u32 %s21, 1
        %s197 = scalar_lea.sflag [#allocation7], %s196
        %s198 = sand.u32 %s55, 1
        %s199 = smul.addr %s198, 1024
        %s200 = scalar_lea.vmem [#allocation6], %s199
        // Predicated region
        $region37: #{tpu_custom_call.1} parent=31 // pred_check
          %p201 = pneg %p68
        $region38: #{tpu_custom_call.1} parent=31 // pred_check_branch
          %203 = sbr.rel (%p201) target = $region40
        $region39: #{tpu_custom_call.1} parent=31 // pred_region
          %204 = dma.done %s197, 16384
        $region40: #{tpu_custom_call.1} parent=31 // pred_fallthru
          _
        // Predicated region
        $region41: #{tpu_custom_call.1} parent=31 // pred_check
          %p205 = pneg %p89
        $region42: #{tpu_custom_call.1} parent=31 // pred_check_branch
          %207 = sbr.rel (%p205) target = $region44
        $region43: #{tpu_custom_call.1} parent=31 // pred_region
          %208 = dma.done [#allocation7], 16
        $region44: #{tpu_custom_call.1} parent=31 // pred_fallthru
          _
        %s209 = sand.u32 %s29, 1
        %s210 = scalar_lea.sflag [#allocation4], %s209
        %s211 = sand.u32 %s29, 1
        %s212 = smul.addr %s211, 64
        %s213 = scalar_lea.vmem [#allocation3], %s212
        %p214 = pneg %p42
        %p215 = pneg %p39
        %s216 = sand.u32 %s21, 1
        %s217 = scalar_lea.sflag [#allocation7], %s216
        %s218 = sand.u32 %s55, 1
        %s219 = smul.addr %s218, 1024
        %s220 = scalar_lea.vmem [#allocation6], %s219
        %p221 = pneg %p68
        %p222 = pneg %p65
        %p223 = pneg %p89
        %p224 = pneg %p86
        %p225 = pneg %p110
        %p226 = pneg %p107
        %s227 = smul.u32 16, %s21
        %s228 = smul.u32 256, %s21
        %p230 = scmp.eq.s32.totalorder %s21, 0
        // Predicated region
        $region45: #{tpu_custom_call.1} parent=31 // pred_check
          %p231 = pneg %p230
        $region46: #{tpu_custom_call.1} parent=31 // pred_check_branch
          %233 = sbr.rel (%p231) target = $region48
        $region47: #{tpu_custom_call.1} parent=31 // pred_region
          %234 = vst [vmem:[#allocation2] sm:$0xff] 0.0
        $region48: #{tpu_custom_call.1} parent=31 // pred_fallthru
          _
        %v235 = vld [vmem:[#allocation2] sm:$0xff]
        %v236 = vld [vmem:[%s191] sm:$0xff]
        %v237 = vld [vmem:[%s191 + $0x8] sm:$0xff]
        %v238 = vld [vmem:[%s191 + $0x10] sm:$0xff]
        %v239 = vld [vmem:[%s191 + $0x18] sm:$0xff]
        %v240 = vld [vmem:[%s191 + $0x20] sm:$0xff]
        %v241 = vld [vmem:[%s191 + $0x28] sm:$0xff]
        %v242 = vld [vmem:[%s191 + $0x30] sm:$0xff]
        %v243 = vld [vmem:[%s191 + $0x38] sm:$0xff]
        %v244 = vld [vmem:[%s200] sm:$0xf]
        %v245 = vld [vmem:[%s200 + $0x4] sm:$0xf]
        %v246 = vld [vmem:[%s200 + $0x8] sm:$0xf]
        %v247 = vld [vmem:[%s200 + $0xc] sm:$0xf]
        %v248 = vld [vmem:[%s200 + $0x10] sm:$0xf]
        %v249 = vld [vmem:[%s200 + $0x14] sm:$0xf]
        %v250 = vld [vmem:[%s200 + $0x18] sm:$0xf]
        %v251 = vld [vmem:[%s200 + $0x1c] sm:$0xf]
        %v252 = vld [vmem:[%s200 + $0x20] sm:$0xf]
        %v253 = vld [vmem:[%s200 + $0x24] sm:$0xf]
        %v254 = vld [vmem:[%s200 + $0x28] sm:$0xf]
        %v255 = vld [vmem:[%s200 + $0x2c] sm:$0xf]
        %v256 = vld [vmem:[%s200 + $0x30] sm:$0xf]
        %v257 = vld [vmem:[%s200 + $0x34] sm:$0xf]
        %v258 = vld [vmem:[%s200 + $0x38] sm:$0xf]
        %v259 = vld [vmem:[%s200 + $0x3c] sm:$0xf]
        %v260 = vld [vmem:[%s200 + $0x40] sm:$0xf]
        %v261 = vld [vmem:[%s200 + $0x44] sm:$0xf]
        %v262 = vld [vmem:[%s200 + $0x48] sm:$0xf]
        %v263 = vld [vmem:[%s200 + $0x4c] sm:$0xf]
        %v264 = vld [vmem:[%s200 + $0x50] sm:$0xf]
        %v265 = vld [vmem:[%s200 + $0x54] sm:$0xf]
        %v266 = vld [vmem:[%s200 + $0x58] sm:$0xf]
        %v267 = vld [vmem:[%s200 + $0x5c] sm:$0xf]
        %v268 = vld [vmem:[%s200 + $0x60] sm:$0xf]
        %v269 = vld [vmem:[%s200 + $0x64] sm:$0xf]
        %v270 = vld [vmem:[%s200 + $0x68] sm:$0xf]
        %v271 = vld [vmem:[%s200 + $0x6c] sm:$0xf]
        %v272 = vld [vmem:[%s200 + $0x70] sm:$0xf]
        %v273 = vld [vmem:[%s200 + $0x74] sm:$0xf]
        %v274 = vld [vmem:[%s200 + $0x78] sm:$0xf]
        %v275 = vld [vmem:[%s200 + $0x7c] sm:$0xf]
        %v276 = vld [vmem:[%s200 + $0x80] sm:$0xf]
        %v277 = vld [vmem:[%s200 + $0x84] sm:$0xf]
        %v278 = vld [vmem:[%s200 + $0x88] sm:$0xf]
        %v279 = vld [vmem:[%s200 + $0x8c] sm:$0xf]
        %v280 = vld [vmem:[%s200 + $0x90] sm:$0xf]
        %v281 = vld [vmem:[%s200 + $0x94] sm:$0xf]
        %v282 = vld [vmem:[%s200 + $0x98] sm:$0xf]
        %v283 = vld [vmem:[%s200 + $0x9c] sm:$0xf]
        %v284 = vld [vmem:[%s200 + $0xa0] sm:$0xf]
        %v285 = vld [vmem:[%s200 + $0xa4] sm:$0xf]
        %v286 = vld [vmem:[%s200 + $0xa8] sm:$0xf]
        %v287 = vld [vmem:[%s200 + $0xac] sm:$0xf]
        %v288 = vld [vmem:[%s200 + $0xb0] sm:$0xf]
        %v289 = vld [vmem:[%s200 + $0xb4] sm:$0xf]
        %v290 = vld [vmem:[%s200 + $0xb8] sm:$0xf]
        %v291 = vld [vmem:[%s200 + $0xbc] sm:$0xf]
        %v292 = vld [vmem:[%s200 + $0xc0] sm:$0xf]
        %v293 = vld [vmem:[%s200 + $0xc4] sm:$0xf]
        %v294 = vld [vmem:[%s200 + $0xc8] sm:$0xf]
        %v295 = vld [vmem:[%s200 + $0xcc] sm:$0xf]
        %v296 = vld [vmem:[%s200 + $0xd0] sm:$0xf]
        %v297 = vld [vmem:[%s200 + $0xd4] sm:$0xf]
        %v298 = vld [vmem:[%s200 + $0xd8] sm:$0xf]
        %v299 = vld [vmem:[%s200 + $0xdc] sm:$0xf]
        %v300 = vld [vmem:[%s200 + $0xe0] sm:$0xf]
        %v301 = vld [vmem:[%s200 + $0xe4] sm:$0xf]
        %v302 = vld [vmem:[%s200 + $0xe8] sm:$0xf]
        %v303 = vld [vmem:[%s200 + $0xec] sm:$0xf]
        %v304 = vld [vmem:[%s200 + $0xf0] sm:$0xf]
        %v305 = vld [vmem:[%s200 + $0xf4] sm:$0xf]
        %v306 = vld [vmem:[%s200 + $0xf8] sm:$0xf]
        %v307 = vld [vmem:[%s200 + $0xfc] sm:$0xf]
        %v308 = vld [vmem:[%s200 + $0x100] sm:$0xf]
        %v309 = vld [vmem:[%s200 + $0x104] sm:$0xf]
        %v310 = vld [vmem:[%s200 + $0x108] sm:$0xf]
        %v311 = vld [vmem:[%s200 + $0x10c] sm:$0xf]
        %v312 = vld [vmem:[%s200 + $0x110] sm:$0xf]
        %v313 = vld [vmem:[%s200 + $0x114] sm:$0xf]
        %v314 = vld [vmem:[%s200 + $0x118] sm:$0xf]
        %v315 = vld [vmem:[%s200 + $0x11c] sm:$0xf]
        %v316 = vld [vmem:[%s200 + $0x120] sm:$0xf]
        %v317 = vld [vmem:[%s200 + $0x124] sm:$0xf]
        %v318 = vld [vmem:[%s200 + $0x128] sm:$0xf]
        %v319 = vld [vmem:[%s200 + $0x12c] sm:$0xf]
        %v320 = vld [vmem:[%s200 + $0x130] sm:$0xf]
        %v321 = vld [vmem:[%s200 + $0x134] sm:$0xf]
        %v322 = vld [vmem:[%s200 + $0x138] sm:$0xf]
        %v323 = vld [vmem:[%s200 + $0x13c] sm:$0xf]
        %v324 = vld [vmem:[%s200 + $0x140] sm:$0xf]
        %v325 = vld [vmem:[%s200 + $0x144] sm:$0xf]
        %v326 = vld [vmem:[%s200 + $0x148] sm:$0xf]
        %v327 = vld [vmem:[%s200 + $0x14c] sm:$0xf]
        %v328 = vld [vmem:[%s200 + $0x150] sm:$0xf]
        %v329 = vld [vmem:[%s200 + $0x154] sm:$0xf]
        %v330 = vld [vmem:[%s200 + $0x158] sm:$0xf]
        %v331 = vld [vmem:[%s200 + $0x15c] sm:$0xf]
        %v332 = vld [vmem:[%s200 + $0x160] sm:$0xf]
        %v333 = vld [vmem:[%s200 + $0x164] sm:$0xf]
        %v334 = vld [vmem:[%s200 + $0x168] sm:$0xf]
        %v335 = vld [vmem:[%s200 + $0x16c] sm:$0xf]
        %v336 = vld [vmem:[%s200 + $0x170] sm:$0xf]
        %v337 = vld [vmem:[%s200 + $0x174] sm:$0xf]
        %v338 = vld [vmem:[%s200 + $0x178] sm:$0xf]
        %v339 = vld [vmem:[%s200 + $0x17c] sm:$0xf]
        %v340 = vld [vmem:[%s200 + $0x180] sm:$0xf]
        %v341 = vld [vmem:[%s200 + $0x184] sm:$0xf]
        %v342 = vld [vmem:[%s200 + $0x188] sm:$0xf]
        %v343 = vld [vmem:[%s200 + $0x18c] sm:$0xf]
        %v344 = vld [vmem:[%s200 + $0x190] sm:$0xf]
        %v345 = vld [vmem:[%s200 + $0x194] sm:$0xf]
        %v346 = vld [vmem:[%s200 + $0x198] sm:$0xf]
        %v347 = vld [vmem:[%s200 + $0x19c] sm:$0xf]
        %v348 = vld [vmem:[%s200 + $0x1a0] sm:$0xf]
        %v349 = vld [vmem:[%s200 + $0x1a4] sm:$0xf]
        %v350 = vld [vmem:[%s200 + $0x1a8] sm:$0xf]
        %v351 = vld [vmem:[%s200 + $0x1ac] sm:$0xf]
        %v352 = vld [vmem:[%s200 + $0x1b0] sm:$0xf]
        %v353 = vld [vmem:[%s200 + $0x1b4] sm:$0xf]
        %v354 = vld [vmem:[%s200 + $0x1b8] sm:$0xf]
        %v355 = vld [vmem:[%s200 + $0x1bc] sm:$0xf]
        %v356 = vld [vmem:[%s200 + $0x1c0] sm:$0xf]
        %v357 = vld [vmem:[%s200 + $0x1c4] sm:$0xf]
        %v358 = vld [vmem:[%s200 + $0x1c8] sm:$0xf]
        %v359 = vld [vmem:[%s200 + $0x1cc] sm:$0xf]
        %v360 = vld [vmem:[%s200 + $0x1d0] sm:$0xf]
        %v361 = vld [vmem:[%s200 + $0x1d4] sm:$0xf]
        %v362 = vld [vmem:[%s200 + $0x1d8] sm:$0xf]
        %v363 = vld [vmem:[%s200 + $0x1dc] sm:$0xf]
        %v364 = vld [vmem:[%s200 + $0x1e0] sm:$0xf]
        %v365 = vld [vmem:[%s200 + $0x1e4] sm:$0xf]
        %v366 = vld [vmem:[%s200 + $0x1e8] sm:$0xf]
        %v367 = vld [vmem:[%s200 + $0x1ec] sm:$0xf]
        %v368 = vld [vmem:[%s200 + $0x1f0] sm:$0xf]
        %v369 = vld [vmem:[%s200 + $0x1f4] sm:$0xf]
        %v370 = vld [vmem:[%s200 + $0x1f8] sm:$0xf]
        %v371 = vld [vmem:[%s200 + $0x1fc] sm:$0xf]
        %v372 = vld [vmem:[%s200 + $0x200] sm:$0xf]
        %v373 = vld [vmem:[%s200 + $0x204] sm:$0xf]
        %v374 = vld [vmem:[%s200 + $0x208] sm:$0xf]
        %v375 = vld [vmem:[%s200 + $0x20c] sm:$0xf]
        %v376 = vld [vmem:[%s200 + $0x210] sm:$0xf]
        %v377 = vld [vmem:[%s200 + $0x214] sm:$0xf]
        %v378 = vld [vmem:[%s200 + $0x218] sm:$0xf]
        %v379 = vld [vmem:[%s200 + $0x21c] sm:$0xf]
        %v380 = vld [vmem:[%s200 + $0x220] sm:$0xf]
        %v381 = vld [vmem:[%s200 + $0x224] sm:$0xf]
        %v382 = vld [vmem:[%s200 + $0x228] sm:$0xf]
        %v383 = vld [vmem:[%s200 + $0x22c] sm:$0xf]
        %v384 = vld [vmem:[%s200 + $0x230] sm:$0xf]
        %v385 = vld [vmem:[%s200 + $0x234] sm:$0xf]
        %v386 = vld [vmem:[%s200 + $0x238] sm:$0xf]
        %v387 = vld [vmem:[%s200 + $0x23c] sm:$0xf]
        %v388 = vld [vmem:[%s200 + $0x240] sm:$0xf]
        %v389 = vld [vmem:[%s200 + $0x244] sm:$0xf]
        %v390 = vld [vmem:[%s200 + $0x248] sm:$0xf]
        %v391 = vld [vmem:[%s200 + $0x24c] sm:$0xf]
        %v392 = vld [vmem:[%s200 + $0x250] sm:$0xf]
        %v393 = vld [vmem:[%s200 + $0x254] sm:$0xf]
        %v394 = vld [vmem:[%s200 + $0x258] sm:$0xf]
        %v395 = vld [vmem:[%s200 + $0x25c] sm:$0xf]
        %v396 = vld [vmem:[%s200 + $0x260] sm:$0xf]
        %v397 = vld [vmem:[%s200 + $0x264] sm:$0xf]
        %v398 = vld [vmem:[%s200 + $0x268] sm:$0xf]
        %v399 = vld [vmem:[%s200 + $0x26c] sm:$0xf]
        %v400 = vld [vmem:[%s200 + $0x270] sm:$0xf]
        %v401 = vld [vmem:[%s200 + $0x274] sm:$0xf]
        %v402 = vld [vmem:[%s200 + $0x278] sm:$0xf]
        %v403 = vld [vmem:[%s200 + $0x27c] sm:$0xf]
        %v404 = vld [vmem:[%s200 + $0x280] sm:$0xf]
        %v405 = vld [vmem:[%s200 + $0x284] sm:$0xf]
        %v406 = vld [vmem:[%s200 + $0x288] sm:$0xf]
        %v407 = vld [vmem:[%s200 + $0x28c] sm:$0xf]
        %v408 = vld [vmem:[%s200 + $0x290] sm:$0xf]
        %v409 = vld [vmem:[%s200 + $0x294] sm:$0xf]
        %v410 = vld [vmem:[%s200 + $0x298] sm:$0xf]
        %v411 = vld [vmem:[%s200 + $0x29c] sm:$0xf]
        %v412 = vld [vmem:[%s200 + $0x2a0] sm:$0xf]
        %v413 = vld [vmem:[%s200 + $0x2a4] sm:$0xf]
        %v414 = vld [vmem:[%s200 + $0x2a8] sm:$0xf]
        %v415 = vld [vmem:[%s200 + $0x2ac] sm:$0xf]
        %v416 = vld [vmem:[%s200 + $0x2b0] sm:$0xf]
        %v417 = vld [vmem:[%s200 + $0x2b4] sm:$0xf]
        %v418 = vld [vmem:[%s200 + $0x2b8] sm:$0xf]
        %v419 = vld [vmem:[%s200 + $0x2bc] sm:$0xf]
        %v420 = vld [vmem:[%s200 + $0x2c0] sm:$0xf]
        %v421 = vld [vmem:[%s200 + $0x2c4] sm:$0xf]
        %v422 = vld [vmem:[%s200 + $0x2c8] sm:$0xf]
        %v423 = vld [vmem:[%s200 + $0x2cc] sm:$0xf]
        %v424 = vld [vmem:[%s200 + $0x2d0] sm:$0xf]
        %v425 = vld [vmem:[%s200 + $0x2d4] sm:$0xf]
        %v426 = vld [vmem:[%s200 + $0x2d8] sm:$0xf]
        %v427 = vld [vmem:[%s200 + $0x2dc] sm:$0xf]
        %v428 = vld [vmem:[%s200 + $0x2e0] sm:$0xf]
        %v429 = vld [vmem:[%s200 + $0x2e4] sm:$0xf]
        %v430 = vld [vmem:[%s200 + $0x2e8] sm:$0xf]
        %v431 = vld [vmem:[%s200 + $0x2ec] sm:$0xf]
        %v432 = vld [vmem:[%s200 + $0x2f0] sm:$0xf]
        %v433 = vld [vmem:[%s200 + $0x2f4] sm:$0xf]
        %v434 = vld [vmem:[%s200 + $0x2f8] sm:$0xf]
        %v435 = vld [vmem:[%s200 + $0x2fc] sm:$0xf]
        %v436 = vld [vmem:[%s200 + $0x300] sm:$0xf]
        %v437 = vld [vmem:[%s200 + $0x304] sm:$0xf]
        %v438 = vld [vmem:[%s200 + $0x308] sm:$0xf]
        %v439 = vld [vmem:[%s200 + $0x30c] sm:$0xf]
        %v440 = vld [vmem:[%s200 + $0x310] sm:$0xf]
        %v441 = vld [vmem:[%s200 + $0x314] sm:$0xf]
        %v442 = vld [vmem:[%s200 + $0x318] sm:$0xf]
        %v443 = vld [vmem:[%s200 + $0x31c] sm:$0xf]
        %v444 = vld [vmem:[%s200 + $0x320] sm:$0xf]
        %v445 = vld [vmem:[%s200 + $0x324] sm:$0xf]
        %v446 = vld [vmem:[%s200 + $0x328] sm:$0xf]
        %v447 = vld [vmem:[%s200 + $0x32c] sm:$0xf]
        %v448 = vld [vmem:[%s200 + $0x330] sm:$0xf]
        %v449 = vld [vmem:[%s200 + $0x334] sm:$0xf]
        %v450 = vld [vmem:[%s200 + $0x338] sm:$0xf]
        %v451 = vld [vmem:[%s200 + $0x33c] sm:$0xf]
        %v452 = vld [vmem:[%s200 + $0x340] sm:$0xf]
        %v453 = vld [vmem:[%s200 + $0x344] sm:$0xf]
        %v454 = vld [vmem:[%s200 + $0x348] sm:$0xf]
        %v455 = vld [vmem:[%s200 + $0x34c] sm:$0xf]
        %v456 = vld [vmem:[%s200 + $0x350] sm:$0xf]
        %v457 = vld [vmem:[%s200 + $0x354] sm:$0xf]
        %v458 = vld [vmem:[%s200 + $0x358] sm:$0xf]
        %v459 = vld [vmem:[%s200 + $0x35c] sm:$0xf]
        %v460 = vld [vmem:[%s200 + $0x360] sm:$0xf]
        %v461 = vld [vmem:[%s200 + $0x364] sm:$0xf]
        %v462 = vld [vmem:[%s200 + $0x368] sm:$0xf]
        %v463 = vld [vmem:[%s200 + $0x36c] sm:$0xf]
        %v464 = vld [vmem:[%s200 + $0x370] sm:$0xf]
        %v465 = vld [vmem:[%s200 + $0x374] sm:$0xf]
        %v466 = vld [vmem:[%s200 + $0x378] sm:$0xf]
        %v467 = vld [vmem:[%s200 + $0x37c] sm:$0xf]
        %v468 = vld [vmem:[%s200 + $0x380] sm:$0xf]
        %v469 = vld [vmem:[%s200 + $0x384] sm:$0xf]
        %v470 = vld [vmem:[%s200 + $0x388] sm:$0xf]
        %v471 = vld [vmem:[%s200 + $0x38c] sm:$0xf]
        %v472 = vld [vmem:[%s200 + $0x390] sm:$0xf]
        %v473 = vld [vmem:[%s200 + $0x394] sm:$0xf]
        %v474 = vld [vmem:[%s200 + $0x398] sm:$0xf]
        %v475 = vld [vmem:[%s200 + $0x39c] sm:$0xf]
        %v476 = vld [vmem:[%s200 + $0x3a0] sm:$0xf]
        %v477 = vld [vmem:[%s200 + $0x3a4] sm:$0xf]
        %v478 = vld [vmem:[%s200 + $0x3a8] sm:$0xf]
        %v479 = vld [vmem:[%s200 + $0x3ac] sm:$0xf]
        %v480 = vld [vmem:[%s200 + $0x3b0] sm:$0xf]
        %v481 = vld [vmem:[%s200 + $0x3b4] sm:$0xf]
        %v482 = vld [vmem:[%s200 + $0x3b8] sm:$0xf]
        %v483 = vld [vmem:[%s200 + $0x3bc] sm:$0xf]
        %v484 = vld [vmem:[%s200 + $0x3c0] sm:$0xf]
        %v485 = vld [vmem:[%s200 + $0x3c4] sm:$0xf]
        %v486 = vld [vmem:[%s200 + $0x3c8] sm:$0xf]
        %v487 = vld [vmem:[%s200 + $0x3cc] sm:$0xf]
        %v488 = vld [vmem:[%s200 + $0x3d0] sm:$0xf]
        %v489 = vld [vmem:[%s200 + $0x3d4] sm:$0xf]
        %v490 = vld [vmem:[%s200 + $0x3d8] sm:$0xf]
        %v491 = vld [vmem:[%s200 + $0x3dc] sm:$0xf]
        %v492 = vld [vmem:[%s200 + $0x3e0] sm:$0xf]
        %v493 = vld [vmem:[%s200 + $0x3e4] sm:$0xf]
        %v494 = vld [vmem:[%s200 + $0x3e8] sm:$0xf]
        %v495 = vld [vmem:[%s200 + $0x3ec] sm:$0xf]
        %v496 = vld [vmem:[%s200 + $0x3f0] sm:$0xf]
        %v497 = vld [vmem:[%s200 + $0x3f4] sm:$0xf]
        %v498 = vld [vmem:[%s200 + $0x3f8] sm:$0xf]
        %v499 = vld [vmem:[%s200 + $0x3fc] sm:$0xf]
        %v508 = vunpack.c.l.b16 %v236
        %v509 = vunpack.c.h.b16 %v236
        %v510 = vunpack.c.l.b16 %v237
        %v511 = vunpack.c.h.b16 %v237
        %v512 = vunpack.c.l.b16 %v238
        %v513 = vunpack.c.h.b16 %v238
        %v514 = vunpack.c.l.b16 %v239
        %v515 = vunpack.c.h.b16 %v239
        %v516 = vunpack.c.l.b16 %v240
        %v517 = vunpack.c.h.b16 %v240
        %v518 = vunpack.c.l.b16 %v241
        %v519 = vunpack.c.h.b16 %v241
        %v520 = vunpack.c.l.b16 %v242
        %v521 = vunpack.c.h.b16 %v242
        %v522 = vunpack.c.l.b16 %v243
        %v523 = vunpack.c.h.b16 %v243
        %v524 = vpack.c.b16 %v508, %v508
        %v525 = vpack.c.b16 %v509, %v509
        %v526 = vpack.c.b16 %v510, %v510
        %v527 = vpack.c.b16 %v511, %v511
        %v528 = vpack.c.b16 %v512, %v512
        %v529 = vpack.c.b16 %v513, %v513
        %v530 = vpack.c.b16 %v514, %v514
        %v531 = vpack.c.b16 %v515, %v515
        %v532 = vpack.c.b16 %v516, %v516
        %v533 = vpack.c.b16 %v517, %v517
        %v534 = vpack.c.b16 %v518, %v518
        %v535 = vpack.c.b16 %v519, %v519
        %v536 = vpack.c.b16 %v520, %v520
        %v537 = vpack.c.b16 %v521, %v521
        %v538 = vpack.c.b16 %v522, %v522
        %v539 = vpack.c.b16 %v523, %v523
        %v812 = vunpack.c.l.b16 %v244
        %v813 = vunpack.c.l.b16 %v245
        %v814 = vunpack.c.l.b16 %v246
        %v815 = vunpack.c.l.b16 %v247
        %v816 = vunpack.c.l.b16 %v248
        %v817 = vunpack.c.l.b16 %v249
        %v818 = vunpack.c.l.b16 %v250
        %v819 = vunpack.c.l.b16 %v251
        %v820 = vunpack.c.l.b16 %v252
        %v821 = vunpack.c.l.b16 %v253
        %v822 = vunpack.c.l.b16 %v254
        %v823 = vunpack.c.l.b16 %v255
        %v824 = vunpack.c.l.b16 %v256
        %v825 = vunpack.c.l.b16 %v257
        %v826 = vunpack.c.l.b16 %v258
        %v827 = vunpack.c.l.b16 %v259
        %v828 = vunpack.c.l.b16 %v260
        %v829 = vunpack.c.l.b16 %v261
        %v830 = vunpack.c.l.b16 %v262
        %v831 = vunpack.c.l.b16 %v263
        %v832 = vunpack.c.l.b16 %v264
        %v833 = vunpack.c.l.b16 %v265
        %v834 = vunpack.c.l.b16 %v266
        %v835 = vunpack.c.l.b16 %v267
        %v836 = vunpack.c.l.b16 %v268
        %v837 = vunpack.c.l.b16 %v269
        %v838 = vunpack.c.l.b16 %v270
        %v839 = vunpack.c.l.b16 %v271
        %v840 = vunpack.c.l.b16 %v272
        %v841 = vunpack.c.l.b16 %v273
        %v842 = vunpack.c.l.b16 %v274
        %v843 = vunpack.c.l.b16 %v275
        %v844 = vunpack.c.l.b16 %v276
        %v845 = vunpack.c.l.b16 %v277
        %v846 = vunpack.c.l.b16 %v278
        %v847 = vunpack.c.l.b16 %v279
        %v848 = vunpack.c.l.b16 %v280
        %v849 = vunpack.c.l.b16 %v281
        %v850 = vunpack.c.l.b16 %v282
        %v851 = vunpack.c.l.b16 %v283
        %v852 = vunpack.c.l.b16 %v284
        %v853 = vunpack.c.l.b16 %v285
        %v854 = vunpack.c.l.b16 %v286
        %v855 = vunpack.c.l.b16 %v287
        %v856 = vunpack.c.l.b16 %v288
        %v857 = vunpack.c.l.b16 %v289
        %v858 = vunpack.c.l.b16 %v290
        %v859 = vunpack.c.l.b16 %v291
        %v860 = vunpack.c.l.b16 %v292
        %v861 = vunpack.c.l.b16 %v293
        %v862 = vunpack.c.l.b16 %v294
        %v863 = vunpack.c.l.b16 %v295
        %v864 = vunpack.c.l.b16 %v296
        %v865 = vunpack.c.l.b16 %v297
        %v866 = vunpack.c.l.b16 %v298
        %v867 = vunpack.c.l.b16 %v299
        %v868 = vunpack.c.l.b16 %v300
        %v869 = vunpack.c.l.b16 %v301
        %v870 = vunpack.c.l.b16 %v302
        %v871 = vunpack.c.l.b16 %v303
        %v872 = vunpack.c.l.b16 %v304
        %v873 = vunpack.c.l.b16 %v305
        %v874 = vunpack.c.l.b16 %v306
        %v875 = vunpack.c.l.b16 %v307
        %v876 = vunpack.c.l.b16 %v308
        %v877 = vunpack.c.l.b16 %v309
        %v878 = vunpack.c.l.b16 %v310
        %v879 = vunpack.c.l.b16 %v311
        %v880 = vunpack.c.l.b16 %v312
        %v881 = vunpack.c.l.b16 %v313
        %v882 = vunpack.c.l.b16 %v314
        %v883 = vunpack.c.l.b16 %v315
        %v884 = vunpack.c.l.b16 %v316
        %v885 = vunpack.c.l.b16 %v317
        %v886 = vunpack.c.l.b16 %v318
        %v887 = vunpack.c.l.b16 %v319
        %v888 = vunpack.c.l.b16 %v320
        %v889 = vunpack.c.l.b16 %v321
        %v890 = vunpack.c.l.b16 %v322
        %v891 = vunpack.c.l.b16 %v323
        %v892 = vunpack.c.l.b16 %v324
        %v893 = vunpack.c.l.b16 %v325
        %v894 = vunpack.c.l.b16 %v326
        %v895 = vunpack.c.l.b16 %v327
        %v896 = vunpack.c.l.b16 %v328
        %v897 = vunpack.c.l.b16 %v329
        %v898 = vunpack.c.l.b16 %v330
        %v899 = vunpack.c.l.b16 %v331
        %v900 = vunpack.c.l.b16 %v332
        %v901 = vunpack.c.l.b16 %v333
        %v902 = vunpack.c.l.b16 %v334
        %v903 = vunpack.c.l.b16 %v335
        %v904 = vunpack.c.l.b16 %v336
        %v905 = vunpack.c.l.b16 %v337
        %v906 = vunpack.c.l.b16 %v338
        %v907 = vunpack.c.l.b16 %v339
        %v908 = vunpack.c.l.b16 %v340
        %v909 = vunpack.c.l.b16 %v341
        %v910 = vunpack.c.l.b16 %v342
        %v911 = vunpack.c.l.b16 %v343
        %v912 = vunpack.c.l.b16 %v344
        %v913 = vunpack.c.l.b16 %v345
        %v914 = vunpack.c.l.b16 %v346
        %v915 = vunpack.c.l.b16 %v347
        %v916 = vunpack.c.l.b16 %v348
        %v917 = vunpack.c.l.b16 %v349
        %v918 = vunpack.c.l.b16 %v350
        %v919 = vunpack.c.l.b16 %v351
        %v920 = vunpack.c.l.b16 %v352
        %v921 = vunpack.c.l.b16 %v353
        %v922 = vunpack.c.l.b16 %v354
        %v923 = vunpack.c.l.b16 %v355
        %v924 = vunpack.c.l.b16 %v356
        %v925 = vunpack.c.l.b16 %v357
        %v926 = vunpack.c.l.b16 %v358
        %v927 = vunpack.c.l.b16 %v359
        %v928 = vunpack.c.l.b16 %v360
        %v929 = vunpack.c.l.b16 %v361
        %v930 = vunpack.c.l.b16 %v362
        %v931 = vunpack.c.l.b16 %v363
        %v932 = vunpack.c.l.b16 %v364
        %v933 = vunpack.c.l.b16 %v365
        %v934 = vunpack.c.l.b16 %v366
        %v935 = vunpack.c.l.b16 %v367
        %v936 = vunpack.c.l.b16 %v368
        %v937 = vunpack.c.l.b16 %v369
        %v938 = vunpack.c.l.b16 %v370
        %v939 = vunpack.c.l.b16 %v371
        %v940 = vunpack.c.l.b16 %v372
        %v941 = vunpack.c.l.b16 %v373
        %v942 = vunpack.c.l.b16 %v374
        %v943 = vunpack.c.l.b16 %v375
        %v944 = vunpack.c.l.b16 %v376
        %v945 = vunpack.c.l.b16 %v377
        %v946 = vunpack.c.l.b16 %v378
        %v947 = vunpack.c.l.b16 %v379
        %v948 = vunpack.c.l.b16 %v380
        %v949 = vunpack.c.l.b16 %v381
        %v950 = vunpack.c.l.b16 %v382
        %v951 = vunpack.c.l.b16 %v383
        %v952 = vunpack.c.l.b16 %v384
        %v953 = vunpack.c.l.b16 %v385
        %v954 = vunpack.c.l.b16 %v386
        %v955 = vunpack.c.l.b16 %v387
        %v956 = vunpack.c.l.b16 %v388
        %v957 = vunpack.c.l.b16 %v389
        %v958 = vunpack.c.l.b16 %v390
        %v959 = vunpack.c.l.b16 %v391
        %v960 = vunpack.c.l.b16 %v392
        %v961 = vunpack.c.l.b16 %v393
        %v962 = vunpack.c.l.b16 %v394
        %v963 = vunpack.c.l.b16 %v395
        %v964 = vunpack.c.l.b16 %v396
        %v965 = vunpack.c.l.b16 %v397
        %v966 = vunpack.c.l.b16 %v398
        %v967 = vunpack.c.l.b16 %v399
        %v968 = vunpack.c.l.b16 %v400
        %v969 = vunpack.c.l.b16 %v401
        %v970 = vunpack.c.l.b16 %v402
        %v971 = vunpack.c.l.b16 %v403
        %v972 = vunpack.c.l.b16 %v404
        %v973 = vunpack.c.l.b16 %v405
        %v974 = vunpack.c.l.b16 %v406
        %v975 = vunpack.c.l.b16 %v407
        %v976 = vunpack.c.l.b16 %v408
        %v977 = vunpack.c.l.b16 %v409
        %v978 = vunpack.c.l.b16 %v410
        %v979 = vunpack.c.l.b16 %v411
        %v980 = vunpack.c.l.b16 %v412
        %v981 = vunpack.c.l.b16 %v413
        %v982 = vunpack.c.l.b16 %v414
        %v983 = vunpack.c.l.b16 %v415
        %v984 = vunpack.c.l.b16 %v416
        %v985 = vunpack.c.l.b16 %v417
        %v986 = vunpack.c.l.b16 %v418
        %v987 = vunpack.c.l.b16 %v419
        %v988 = vunpack.c.l.b16 %v420
        %v989 = vunpack.c.l.b16 %v421
        %v990 = vunpack.c.l.b16 %v422
        %v991 = vunpack.c.l.b16 %v423
        %v992 = vunpack.c.l.b16 %v424
        %v993 = vunpack.c.l.b16 %v425
        %v994 = vunpack.c.l.b16 %v426
        %v995 = vunpack.c.l.b16 %v427
        %v996 = vunpack.c.l.b16 %v428
        %v997 = vunpack.c.l.b16 %v429
        %v998 = vunpack.c.l.b16 %v430
        %v999 = vunpack.c.l.b16 %v431
        %v1000 = vunpack.c.l.b16 %v432
        %v1001 = vunpack.c.l.b16 %v433
        %v1002 = vunpack.c.l.b16 %v434
        %v1003 = vunpack.c.l.b16 %v435
        %v1004 = vunpack.c.l.b16 %v436
        %v1005 = vunpack.c.l.b16 %v437
        %v1006 = vunpack.c.l.b16 %v438
        %v1007 = vunpack.c.l.b16 %v439
        %v1008 = vunpack.c.l.b16 %v440
        %v1009 = vunpack.c.l.b16 %v441
        %v1010 = vunpack.c.l.b16 %v442
        %v1011 = vunpack.c.l.b16 %v443
        %v1012 = vunpack.c.l.b16 %v444
        %v1013 = vunpack.c.l.b16 %v445
        %v1014 = vunpack.c.l.b16 %v446
        %v1015 = vunpack.c.l.b16 %v447
        %v1016 = vunpack.c.l.b16 %v448
        %v1017 = vunpack.c.l.b16 %v449
        %v1018 = vunpack.c.l.b16 %v450
        %v1019 = vunpack.c.l.b16 %v451
        %v1020 = vunpack.c.l.b16 %v452
        %v1021 = vunpack.c.l.b16 %v453
        %v1022 = vunpack.c.l.b16 %v454
        %v1023 = vunpack.c.l.b16 %v455
        %v1024 = vunpack.c.l.b16 %v456
        %v1025 = vunpack.c.l.b16 %v457
        %v1026 = vunpack.c.l.b16 %v458
        %v1027 = vunpack.c.l.b16 %v459
        %v1028 = vunpack.c.l.b16 %v460
        %v1029 = vunpack.c.l.b16 %v461
        %v1030 = vunpack.c.l.b16 %v462
        %v1031 = vunpack.c.l.b16 %v463
        %v1032 = vunpack.c.l.b16 %v464
        %v1033 = vunpack.c.l.b16 %v465
        %v1034 = vunpack.c.l.b16 %v466
        %v1035 = vunpack.c.l.b16 %v467
        %v1036 = vunpack.c.l.b16 %v468
        %v1037 = vunpack.c.l.b16 %v469
        %v1038 = vunpack.c.l.b16 %v470
        %v1039 = vunpack.c.l.b16 %v471
        %v1040 = vunpack.c.l.b16 %v472
        %v1041 = vunpack.c.l.b16 %v473
        %v1042 = vunpack.c.l.b16 %v474
        %v1043 = vunpack.c.l.b16 %v475
        %v1044 = vunpack.c.l.b16 %v476
        %v1045 = vunpack.c.l.b16 %v477
        %v1046 = vunpack.c.l.b16 %v478
        %v1047 = vunpack.c.l.b16 %v479
        %v1048 = vunpack.c.l.b16 %v480
        %v1049 = vunpack.c.l.b16 %v481
        %v1050 = vunpack.c.l.b16 %v482
        %v1051 = vunpack.c.l.b16 %v483
        %v1052 = vunpack.c.l.b16 %v484
        %v1053 = vunpack.c.l.b16 %v485
        %v1054 = vunpack.c.l.b16 %v486
        %v1055 = vunpack.c.l.b16 %v487
        %v1056 = vunpack.c.l.b16 %v488
        %v1057 = vunpack.c.l.b16 %v489
        %v1058 = vunpack.c.l.b16 %v490
        %v1059 = vunpack.c.l.b16 %v491
        %v1060 = vunpack.c.l.b16 %v492
        %v1061 = vunpack.c.l.b16 %v493
        %v1062 = vunpack.c.l.b16 %v494
        %v1063 = vunpack.c.l.b16 %v495
        %v1064 = vunpack.c.l.b16 %v496
        %v1065 = vunpack.c.l.b16 %v497
        %v1066 = vunpack.c.l.b16 %v498
        %v1067 = vunpack.c.l.b16 %v499
        %v1068 = vpack.c.b16 %v813, %v812
        %v1069 = vpack.c.b16 %v815, %v814
        %v1070 = vpack.c.b16 %v817, %v816
        %v1071 = vpack.c.b16 %v819, %v818
        %v1072 = vpack.c.b16 %v821, %v820
        %v1073 = vpack.c.b16 %v823, %v822
        %v1074 = vpack.c.b16 %v825, %v824
        %v1075 = vpack.c.b16 %v827, %v826
        %v1076 = vpack.c.b16 %v829, %v828
        %v1077 = vpack.c.b16 %v831, %v830
        %v1078 = vpack.c.b16 %v833, %v832
        %v1079 = vpack.c.b16 %v835, %v834
        %v1080 = vpack.c.b16 %v837, %v836
        %v1081 = vpack.c.b16 %v839, %v838
        %v1082 = vpack.c.b16 %v841, %v840
        %v1083 = vpack.c.b16 %v843, %v842
        %v1084 = vpack.c.b16 %v845, %v844
        %v1085 = vpack.c.b16 %v847, %v846
        %v1086 = vpack.c.b16 %v849, %v848
        %v1087 = vpack.c.b16 %v851, %v850
        %v1088 = vpack.c.b16 %v853, %v852
        %v1089 = vpack.c.b16 %v855, %v854
        %v1090 = vpack.c.b16 %v857, %v856
        %v1091 = vpack.c.b16 %v859, %v858
        %v1092 = vpack.c.b16 %v861, %v860
        %v1093 = vpack.c.b16 %v863, %v862
        %v1094 = vpack.c.b16 %v865, %v864
        %v1095 = vpack.c.b16 %v867, %v866
        %v1096 = vpack.c.b16 %v869, %v868
        %v1097 = vpack.c.b16 %v871, %v870
        %v1098 = vpack.c.b16 %v873, %v872
        %v1099 = vpack.c.b16 %v875, %v874
        %v1100 = vpack.c.b16 %v877, %v876
        %v1101 = vpack.c.b16 %v879, %v878
        %v1102 = vpack.c.b16 %v881, %v880
        %v1103 = vpack.c.b16 %v883, %v882
        %v1104 = vpack.c.b16 %v885, %v884
        %v1105 = vpack.c.b16 %v887, %v886
        %v1106 = vpack.c.b16 %v889, %v888
        %v1107 = vpack.c.b16 %v891, %v890
        %v1108 = vpack.c.b16 %v893, %v892
        %v1109 = vpack.c.b16 %v895, %v894
        %v1110 = vpack.c.b16 %v897, %v896
        %v1111 = vpack.c.b16 %v899, %v898
        %v1112 = vpack.c.b16 %v901, %v900
        %v1113 = vpack.c.b16 %v903, %v902
        %v1114 = vpack.c.b16 %v905, %v904
        %v1115 = vpack.c.b16 %v907, %v906
        %v1116 = vpack.c.b16 %v909, %v908
        %v1117 = vpack.c.b16 %v911, %v910
        %v1118 = vpack.c.b16 %v913, %v912
        %v1119 = vpack.c.b16 %v915, %v914
        %v1120 = vpack.c.b16 %v917, %v916
        %v1121 = vpack.c.b16 %v919, %v918
        %v1122 = vpack.c.b16 %v921, %v920
        %v1123 = vpack.c.b16 %v923, %v922
        %v1124 = vpack.c.b16 %v925, %v924
        %v1125 = vpack.c.b16 %v927, %v926
        %v1126 = vpack.c.b16 %v929, %v928
        %v1127 = vpack.c.b16 %v931, %v930
        %v1128 = vpack.c.b16 %v933, %v932
        %v1129 = vpack.c.b16 %v935, %v934
        %v1130 = vpack.c.b16 %v937, %v936
        %v1131 = vpack.c.b16 %v939, %v938
        %v1132 = vpack.c.b16 %v941, %v940
        %v1133 = vpack.c.b16 %v943, %v942
        %v1134 = vpack.c.b16 %v945, %v944
        %v1135 = vpack.c.b16 %v947, %v946
        %v1136 = vpack.c.b16 %v949, %v948
        %v1137 = vpack.c.b16 %v951, %v950
        %v1138 = vpack.c.b16 %v953, %v952
        %v1139 = vpack.c.b16 %v955, %v954
        %v1140 = vpack.c.b16 %v957, %v956
        %v1141 = vpack.c.b16 %v959, %v958
        %v1142 = vpack.c.b16 %v961, %v960
        %v1143 = vpack.c.b16 %v963, %v962
        %v1144 = vpack.c.b16 %v965, %v964
        %v1145 = vpack.c.b16 %v967, %v966
        %v1146 = vpack.c.b16 %v969, %v968
        %v1147 = vpack.c.b16 %v971, %v970
        %v1148 = vpack.c.b16 %v973, %v972
        %v1149 = vpack.c.b16 %v975, %v974
        %v1150 = vpack.c.b16 %v977, %v976
        %v1151 = vpack.c.b16 %v979, %v978
        %v1152 = vpack.c.b16 %v981, %v980
        %v1153 = vpack.c.b16 %v983, %v982
        %v1154 = vpack.c.b16 %v985, %v984
        %v1155 = vpack.c.b16 %v987, %v986
        %v1156 = vpack.c.b16 %v989, %v988
        %v1157 = vpack.c.b16 %v991, %v990
        %v1158 = vpack.c.b16 %v993, %v992
        %v1159 = vpack.c.b16 %v995, %v994
        %v1160 = vpack.c.b16 %v997, %v996
        %v1161 = vpack.c.b16 %v999, %v998
        %v1162 = vpack.c.b16 %v1001, %v1000
        %v1163 = vpack.c.b16 %v1003, %v1002
        %v1164 = vpack.c.b16 %v1005, %v1004
        %v1165 = vpack.c.b16 %v1007, %v1006
        %v1166 = vpack.c.b16 %v1009, %v1008
        %v1167 = vpack.c.b16 %v1011, %v1010
        %v1168 = vpack.c.b16 %v1013, %v1012
        %v1169 = vpack.c.b16 %v1015, %v1014
        %v1170 = vpack.c.b16 %v1017, %v1016
        %v1171 = vpack.c.b16 %v1019, %v1018
        %v1172 = vpack.c.b16 %v1021, %v1020
        %v1173 = vpack.c.b16 %v1023, %v1022
        %v1174 = vpack.c.b16 %v1025, %v1024
        %v1175 = vpack.c.b16 %v1027, %v1026
        %v1176 = vpack.c.b16 %v1029, %v1028
        %v1177 = vpack.c.b16 %v1031, %v1030
        %v1178 = vpack.c.b16 %v1033, %v1032
        %v1179 = vpack.c.b16 %v1035, %v1034
        %v1180 = vpack.c.b16 %v1037, %v1036
        %v1181 = vpack.c.b16 %v1039, %v1038
        %v1182 = vpack.c.b16 %v1041, %v1040
        %v1183 = vpack.c.b16 %v1043, %v1042
        %v1184 = vpack.c.b16 %v1045, %v1044
        %v1185 = vpack.c.b16 %v1047, %v1046
        %v1186 = vpack.c.b16 %v1049, %v1048
        %v1187 = vpack.c.b16 %v1051, %v1050
        %v1188 = vpack.c.b16 %v1053, %v1052
        %v1189 = vpack.c.b16 %v1055, %v1054
        %v1190 = vpack.c.b16 %v1057, %v1056
        %v1191 = vpack.c.b16 %v1059, %v1058
        %v1192 = vpack.c.b16 %v1061, %v1060
        %v1193 = vpack.c.b16 %v1063, %v1062
        %v1194 = vpack.c.b16 %v1065, %v1064
        %v1195 = vpack.c.b16 %v1067, %v1066
        %1324 = vmatprep.subr.bf16.mxu0 0
        %1325 = vmatpush1.bf16.msra.mxu0 %v1068
        %1326 = vmatprep.subr.bf16.mxu0 0
        %1327 = vmatpush1.bf16.msra.mxu0 %v1069
        %1328 = vmatprep.subr.bf16.mxu0 0
        %1329 = vmatpush1.bf16.msra.mxu0 %v1070
        %1330 = vmatprep.subr.bf16.mxu0 0
        %1331 = vmatpush1.bf16.msra.mxu0 %v1071
        %1332 = vmatprep.subr.bf16.mxu0 0
        %1333 = vmatpush1.bf16.msra.mxu0 %v1072
        %1334 = vmatprep.subr.bf16.mxu0 0
        %1335 = vmatpush1.bf16.msra.mxu0 %v1073
        %1336 = vmatprep.subr.bf16.mxu0 0
        %1337 = vmatpush1.bf16.msra.mxu0 %v1074
        %1338 = vmatprep.subr.bf16.mxu0 0
        %1339 = vmatpush1.bf16.msra.mxu0 %v1075
        %1340 = vmatprep.subr.bf16.mxu0 0
        %1341 = vmatpush1.bf16.msra.mxu0 %v1076
        %1342 = vmatprep.subr.bf16.mxu0 0
        %1343 = vmatpush1.bf16.msra.mxu0 %v1077
        %1344 = vmatprep.subr.bf16.mxu0 0
        %1345 = vmatpush1.bf16.msra.mxu0 %v1078
        %1346 = vmatprep.subr.bf16.mxu0 0
        %1347 = vmatpush1.bf16.msra.mxu0 %v1079
        %1348 = vmatprep.subr.bf16.mxu0 0
        %1349 = vmatpush1.bf16.msra.mxu0 %v1080
        %1350 = vmatprep.subr.bf16.mxu0 0
        %1351 = vmatpush1.bf16.msra.mxu0 %v1081
        %1352 = vmatprep.subr.bf16.mxu0 0
        %1353 = vmatpush1.bf16.msra.mxu0 %v1082
        %1354 = vmatprep.subr.bf16.mxu0 0
        %1355 = vmatpush1.bf16.msra.mxu0 %v1083
        %1356 = vmatprep.mubr.bf16.mxu0 %v525
        %1357 = vmatmul.mubr.bf16.gmra.mrb[0].mxu0 %v524
        %v1358 = vpop.f32.mrb[0].mxu0
        %v1359 = vadd.f32 0.0, %v1358
        %v1360 = vpop.f32.mrb[0].mxu0
        %v1361 = vpop.f32.mrb[0].mxu0
        %v1362 = vpop.f32.mrb[0].mxu0
        %1363 = vdwg.mxu0
        %1364 = vmatprep.subr.bf16.mxu0 0
        %1365 = vmatpush1.bf16.msra.mxu0 %v1084
        %1366 = vmatprep.subr.bf16.mxu0 0
        %1367 = vmatpush1.bf16.msra.mxu0 %v1085
        %1368 = vmatprep.subr.bf16.mxu0 0
        %1369 = vmatpush1.bf16.msra.mxu0 %v1086
        %1370 = vmatprep.subr.bf16.mxu0 0
        %1371 = vmatpush1.bf16.msra.mxu0 %v1087
        %1372 = vmatprep.subr.bf16.mxu0 0
        %1373 = vmatpush1.bf16.msra.mxu0 %v1088
        %1374 = vmatprep.subr.bf16.mxu0 0
        %1375 = vmatpush1.bf16.msra.mxu0 %v1089
        %1376 = vmatprep.subr.bf16.mxu0 0
        %1377 = vmatpush1.bf16.msra.mxu0 %v1090
        %1378 = vmatprep.subr.bf16.mxu0 0
        %1379 = vmatpush1.bf16.msra.mxu0 %v1091
        %1380 = vmatprep.subr.bf16.mxu0 0
        %1381 = vmatpush1.bf16.msra.mxu0 %v1092
        %1382 = vmatprep.subr.bf16.mxu0 0
        %1383 = vmatpush1.bf16.msra.mxu0 %v1093
        %1384 = vmatprep.subr.bf16.mxu0 0
        %1385 = vmatpush1.bf16.msra.mxu0 %v1094
        %1386 = vmatprep.subr.bf16.mxu0 0
        %1387 = vmatpush1.bf16.msra.mxu0 %v1095
        %1388 = vmatprep.subr.bf16.mxu0 0
        %1389 = vmatpush1.bf16.msra.mxu0 %v1096
        %1390 = vmatprep.subr.bf16.mxu0 0
        %1391 = vmatpush1.bf16.msra.mxu0 %v1097
        %1392 = vmatprep.subr.bf16.mxu0 0
        %1393 = vmatpush1.bf16.msra.mxu0 %v1098
        %1394 = vmatprep.subr.bf16.mxu0 0
        %1395 = vmatpush1.bf16.msra.mxu0 %v1099
        %1396 = vmatprep.mubr.bf16.mxu0 %v527
        %1397 = vmatmul.mubr.bf16.gmra.mrb[0].mxu0 %v526
        %v1398 = vpop.f32.mrb[0].mxu0
        %v1399 = vadd.f32 %v1359, %v1398
        %v1400 = vpop.f32.mrb[0].mxu0
        %v1401 = vpop.f32.mrb[0].mxu0
        %v1402 = vpop.f32.mrb[0].mxu0
        %1403 = vdwg.mxu0
        %1404 = vmatprep.subr.bf16.mxu0 0
        %1405 = vmatpush1.bf16.msra.mxu0 %v1100
        %1406 = vmatprep.subr.bf16.mxu0 0
        %1407 = vmatpush1.bf16.msra.mxu0 %v1101
        %1408 = vmatprep.subr.bf16.mxu0 0
        %1409 = vmatpush1.bf16.msra.mxu0 %v1102
        %1410 = vmatprep.subr.bf16.mxu0 0
        %1411 = vmatpush1.bf16.msra.mxu0 %v1103
        %1412 = vmatprep.subr.bf16.mxu0 0
        %1413 = vmatpush1.bf16.msra.mxu0 %v1104
        %1414 = vmatprep.subr.bf16.mxu0 0
        %1415 = vmatpush1.bf16.msra.mxu0 %v1105
        %1416 = vmatprep.subr.bf16.mxu0 0
        %1417 = vmatpush1.bf16.msra.mxu0 %v1106
        %1418 = vmatprep.subr.bf16.mxu0 0
        %1419 = vmatpush1.bf16.msra.mxu0 %v1107
        %1420 = vmatprep.subr.bf16.mxu0 0
        %1421 = vmatpush1.bf16.msra.mxu0 %v1108
        %1422 = vmatprep.subr.bf16.mxu0 0
        %1423 = vmatpush1.bf16.msra.mxu0 %v1109
        %1424 = vmatprep.subr.bf16.mxu0 0
        %1425 = vmatpush1.bf16.msra.mxu0 %v1110
        %1426 = vmatprep.subr.bf16.mxu0 0
        %1427 = vmatpush1.bf16.msra.mxu0 %v1111
        %1428 = vmatprep.subr.bf16.mxu0 0
        %1429 = vmatpush1.bf16.msra.mxu0 %v1112
        %1430 = vmatprep.subr.bf16.mxu0 0
        %1431 = vmatpush1.bf16.msra.mxu0 %v1113
        %1432 = vmatprep.subr.bf16.mxu0 0
        %1433 = vmatpush1.bf16.msra.mxu0 %v1114
        %1434 = vmatprep.subr.bf16.mxu0 0
        %1435 = vmatpush1.bf16.msra.mxu0 %v1115
        %1436 = vmatprep.mubr.bf16.mxu0 %v529
        %1437 = vmatmul.mubr.bf16.gmra.mrb[0].mxu0 %v528
        %v1438 = vpop.f32.mrb[0].mxu0
        %v1439 = vadd.f32 %v1399, %v1438
        %v1440 = vpop.f32.mrb[0].mxu0
        %v1441 = vpop.f32.mrb[0].mxu0
        %v1442 = vpop.f32.mrb[0].mxu0
        %1443 = vdwg.mxu0
        %1444 = vmatprep.subr.bf16.mxu0 0
        %1445 = vmatpush1.bf16.msra.mxu0 %v1116
        %1446 = vmatprep.subr.bf16.mxu0 0
        %1447 = vmatpush1.bf16.msra.mxu0 %v1117
        %1448 = vmatprep.subr.bf16.mxu0 0
        %1449 = vmatpush1.bf16.msra.mxu0 %v1118
        %1450 = vmatprep.subr.bf16.mxu0 0
        %1451 = vmatpush1.bf16.msra.mxu0 %v1119
        %1452 = vmatprep.subr.bf16.mxu0 0
        %1453 = vmatpush1.bf16.msra.mxu0 %v1120
        %1454 = vmatprep.subr.bf16.mxu0 0
        %1455 = vmatpush1.bf16.msra.mxu0 %v1121
        %1456 = vmatprep.subr.bf16.mxu0 0
        %1457 = vmatpush1.bf16.msra.mxu0 %v1122
        %1458 = vmatprep.subr.bf16.mxu0 0
        %1459 = vmatpush1.bf16.msra.mxu0 %v1123
        %1460 = vmatprep.subr.bf16.mxu0 0
        %1461 = vmatpush1.bf16.msra.mxu0 %v1124
        %1462 = vmatprep.subr.bf16.mxu0 0
        %1463 = vmatpush1.bf16.msra.mxu0 %v1125
        %1464 = vmatprep.subr.bf16.mxu0 0
        %1465 = vmatpush1.bf16.msra.mxu0 %v1126
        %1466 = vmatprep.subr.bf16.mxu0 0
        %1467 = vmatpush1.bf16.msra.mxu0 %v1127
        %1468 = vmatprep.subr.bf16.mxu0 0
        %1469 = vmatpush1.bf16.msra.mxu0 %v1128
        %1470 = vmatprep.subr.bf16.mxu0 0
        %1471 = vmatpush1.bf16.msra.mxu0 %v1129
        %1472 = vmatprep.subr.bf16.mxu0 0
        %1473 = vmatpush1.bf16.msra.mxu0 %v1130
        %1474 = vmatprep.subr.bf16.mxu0 0
        %1475 = vmatpush1.bf16.msra.mxu0 %v1131
        %1476 = vmatprep.mubr.bf16.mxu0 %v531
        %1477 = vmatmul.mubr.bf16.gmra.mrb[0].mxu0 %v530
        %v1478 = vpop.f32.mrb[0].mxu0
        %v1479 = vadd.f32 %v1439, %v1478
        %v1480 = vpop.f32.mrb[0].mxu0
        %v1481 = vpop.f32.mrb[0].mxu0
        %v1482 = vpop.f32.mrb[0].mxu0
        %1483 = vdwg.mxu0
        %1484 = vmatprep.subr.bf16.mxu0 0
        %1485 = vmatpush1.bf16.msra.mxu0 %v1132
        %1486 = vmatprep.subr.bf16.mxu0 0
        %1487 = vmatpush1.bf16.msra.mxu0 %v1133
        %1488 = vmatprep.subr.bf16.mxu0 0
        %1489 = vmatpush1.bf16.msra.mxu0 %v1134
        %1490 = vmatprep.subr.bf16.mxu0 0
        %1491 = vmatpush1.bf16.msra.mxu0 %v1135
        %1492 = vmatprep.subr.bf16.mxu0 0
        %1493 = vmatpush1.bf16.msra.mxu0 %v1136
        %1494 = vmatprep.subr.bf16.mxu0 0
        %1495 = vmatpush1.bf16.msra.mxu0 %v1137
        %1496 = vmatprep.subr.bf16.mxu0 0
        %1497 = vmatpush1.bf16.msra.mxu0 %v1138
        %1498 = vmatprep.subr.bf16.mxu0 0
        %1499 = vmatpush1.bf16.msra.mxu0 %v1139
        %1500 = vmatprep.subr.bf16.mxu0 0
        %1501 = vmatpush1.bf16.msra.mxu0 %v1140
        %1502 = vmatprep.subr.bf16.mxu0 0
        %1503 = vmatpush1.bf16.msra.mxu0 %v1141
        %1504 = vmatprep.subr.bf16.mxu0 0
        %1505 = vmatpush1.bf16.msra.mxu0 %v1142
        %1506 = vmatprep.subr.bf16.mxu0 0
        %1507 = vmatpush1.bf16.msra.mxu0 %v1143
        %1508 = vmatprep.subr.bf16.mxu0 0
        %1509 = vmatpush1.bf16.msra.mxu0 %v1144
        %1510 = vmatprep.subr.bf16.mxu0 0
        %1511 = vmatpush1.bf16.msra.mxu0 %v1145
        %1512 = vmatprep.subr.bf16.mxu0 0
        %1513 = vmatpush1.bf16.msra.mxu0 %v1146
        %1514 = vmatprep.subr.bf16.mxu0 0
        %1515 = vmatpush1.bf16.msra.mxu0 %v1147
        %1516 = vmatprep.mubr.bf16.mxu0 %v533
        %1517 = vmatmul.mubr.bf16.gmra.mrb[0].mxu0 %v532
        %v1518 = vpop.f32.mrb[0].mxu0
        %v1519 = vadd.f32 %v1479, %v1518
        %v1520 = vpop.f32.mrb[0].mxu0
        %v1521 = vpop.f32.mrb[0].mxu0
        %v1522 = vpop.f32.mrb[0].mxu0
        %1523 = vdwg.mxu0
        %1524 = vmatprep.subr.bf16.mxu0 0
        %1525 = vmatpush1.bf16.msra.mxu0 %v1148
        %1526 = vmatprep.subr.bf16.mxu0 0
        %1527 = vmatpush1.bf16.msra.mxu0 %v1149
        %1528 = vmatprep.subr.bf16.mxu0 0
        %1529 = vmatpush1.bf16.msra.mxu0 %v1150
        %1530 = vmatprep.subr.bf16.mxu0 0
        %1531 = vmatpush1.bf16.msra.mxu0 %v1151
        %1532 = vmatprep.subr.bf16.mxu0 0
        %1533 = vmatpush1.bf16.msra.mxu0 %v1152
        %1534 = vmatprep.subr.bf16.mxu0 0
        %1535 = vmatpush1.bf16.msra.mxu0 %v1153
        %1536 = vmatprep.subr.bf16.mxu0 0
        %1537 = vmatpush1.bf16.msra.mxu0 %v1154
        %1538 = vmatprep.subr.bf16.mxu0 0
        %1539 = vmatpush1.bf16.msra.mxu0 %v1155
        %1540 = vmatprep.subr.bf16.mxu0 0
        %1541 = vmatpush1.bf16.msra.mxu0 %v1156
        %1542 = vmatprep.subr.bf16.mxu0 0
        %1543 = vmatpush1.bf16.msra.mxu0 %v1157
        %1544 = vmatprep.subr.bf16.mxu0 0
        %1545 = vmatpush1.bf16.msra.mxu0 %v1158
        %1546 = vmatprep.subr.bf16.mxu0 0
        %1547 = vmatpush1.bf16.msra.mxu0 %v1159
        %1548 = vmatprep.subr.bf16.mxu0 0
        %1549 = vmatpush1.bf16.msra.mxu0 %v1160
        %1550 = vmatprep.subr.bf16.mxu0 0
        %1551 = vmatpush1.bf16.msra.mxu0 %v1161
        %1552 = vmatprep.subr.bf16.mxu0 0
        %1553 = vmatpush1.bf16.msra.mxu0 %v1162
        %1554 = vmatprep.subr.bf16.mxu0 0
        %1555 = vmatpush1.bf16.msra.mxu0 %v1163
        %1556 = vmatprep.mubr.bf16.mxu0 %v535
        %1557 = vmatmul.mubr.bf16.gmra.mrb[0].mxu0 %v534
        %v1558 = vpop.f32.mrb[0].mxu0
        %v1559 = vadd.f32 %v1519, %v1558
        %v1560 = vpop.f32.mrb[0].mxu0
        %v1561 = vpop.f32.mrb[0].mxu0
        %v1562 = vpop.f32.mrb[0].mxu0
        %1563 = vdwg.mxu0
        %1564 = vmatprep.subr.bf16.mxu0 0
        %1565 = vmatpush1.bf16.msra.mxu0 %v1164
        %1566 = vmatprep.subr.bf16.mxu0 0
        %1567 = vmatpush1.bf16.msra.mxu0 %v1165
        %1568 = vmatprep.subr.bf16.mxu0 0
        %1569 = vmatpush1.bf16.msra.mxu0 %v1166
        %1570 = vmatprep.subr.bf16.mxu0 0
        %1571 = vmatpush1.bf16.msra.mxu0 %v1167
        %1572 = vmatprep.subr.bf16.mxu0 0
        %1573 = vmatpush1.bf16.msra.mxu0 %v1168
        %1574 = vmatprep.subr.bf16.mxu0 0
        %1575 = vmatpush1.bf16.msra.mxu0 %v1169
        %1576 = vmatprep.subr.bf16.mxu0 0
        %1577 = vmatpush1.bf16.msra.mxu0 %v1170
        %1578 = vmatprep.subr.bf16.mxu0 0
        %1579 = vmatpush1.bf16.msra.mxu0 %v1171
        %1580 = vmatprep.subr.bf16.mxu0 0
        %1581 = vmatpush1.bf16.msra.mxu0 %v1172
        %1582 = vmatprep.subr.bf16.mxu0 0
        %1583 = vmatpush1.bf16.msra.mxu0 %v1173
        %1584 = vmatprep.subr.bf16.mxu0 0
        %1585 = vmatpush1.bf16.msra.mxu0 %v1174
        %1586 = vmatprep.subr.bf16.mxu0 0
        %1587 = vmatpush1.bf16.msra.mxu0 %v1175
        %1588 = vmatprep.subr.bf16.mxu0 0
        %1589 = vmatpush1.bf16.msra.mxu0 %v1176
        %1590 = vmatprep.subr.bf16.mxu0 0
        %1591 = vmatpush1.bf16.msra.mxu0 %v1177
        %1592 = vmatprep.subr.bf16.mxu0 0
        %1593 = vmatpush1.bf16.msra.mxu0 %v1178
        %1594 = vmatprep.subr.bf16.mxu0 0
        %1595 = vmatpush1.bf16.msra.mxu0 %v1179
        %1596 = vmatprep.mubr.bf16.mxu0 %v537
        %1597 = vmatmul.mubr.bf16.gmra.mrb[0].mxu0 %v536
        %v1598 = vpop.f32.mrb[0].mxu0
        %v1599 = vadd.f32 %v1559, %v1598
        %v1600 = vpop.f32.mrb[0].mxu0
        %v1601 = vpop.f32.mrb[0].mxu0
        %v1602 = vpop.f32.mrb[0].mxu0
        %1603 = vdwg.mxu0
        %1604 = vmatprep.subr.bf16.mxu0 0
        %1605 = vmatpush1.bf16.msra.mxu0 %v1180
        %1606 = vmatprep.subr.bf16.mxu0 0
        %1607 = vmatpush1.bf16.msra.mxu0 %v1181
        %1608 = vmatprep.subr.bf16.mxu0 0
        %1609 = vmatpush1.bf16.msra.mxu0 %v1182
        %1610 = vmatprep.subr.bf16.mxu0 0
        %1611 = vmatpush1.bf16.msra.mxu0 %v1183
        %1612 = vmatprep.subr.bf16.mxu0 0
        %1613 = vmatpush1.bf16.msra.mxu0 %v1184
        %1614 = vmatprep.subr.bf16.mxu0 0
        %1615 = vmatpush1.bf16.msra.mxu0 %v1185
        %1616 = vmatprep.subr.bf16.mxu0 0
        %1617 = vmatpush1.bf16.msra.mxu0 %v1186
        %1618 = vmatprep.subr.bf16.mxu0 0
        %1619 = vmatpush1.bf16.msra.mxu0 %v1187
        %1620 = vmatprep.subr.bf16.mxu0 0
        %1621 = vmatpush1.bf16.msra.mxu0 %v1188
        %1622 = vmatprep.subr.bf16.mxu0 0
        %1623 = vmatpush1.bf16.msra.mxu0 %v1189
        %1624 = vmatprep.subr.bf16.mxu0 0
        %1625 = vmatpush1.bf16.msra.mxu0 %v1190
        %1626 = vmatprep.subr.bf16.mxu0 0
        %1627 = vmatpush1.bf16.msra.mxu0 %v1191
        %1628 = vmatprep.subr.bf16.mxu0 0
        %1629 = vmatpush1.bf16.msra.mxu0 %v1192
        %1630 = vmatprep.subr.bf16.mxu0 0
        %1631 = vmatpush1.bf16.msra.mxu0 %v1193
        %1632 = vmatprep.subr.bf16.mxu0 0
        %1633 = vmatpush1.bf16.msra.mxu0 %v1194
        %1634 = vmatprep.subr.bf16.mxu0 0
        %1635 = vmatpush1.bf16.msra.mxu0 %v1195
        %1636 = vmatprep.mubr.bf16.mxu0 %v539
        %1637 = vmatmul.mubr.bf16.gmra.mrb[0].mxu0 %v538
        %v1638 = vpop.f32.mrb[0].mxu0
        %v1639 = vadd.f32 %v1599, %v1638
        %v1640 = vpop.f32.mrb[0].mxu0
        %v1641 = vpop.f32.mrb[0].mxu0
        %v1642 = vpop.f32.mrb[0].mxu0
        %1643 = vdwg.mxu0
        %v1644 = vadd.f32 %v235, %v1639
        %1645 = vst [vmem:[#allocation2] sm:$0xff] %v1644
        %p1646 = scmp.eq.s32.totalorder %s21, 8
        // Predicated region
        $region49: #{tpu_custom_call.1} parent=31 // pred_check
          %p1647 = pneg %p1646
        $region50: #{tpu_custom_call.1} parent=31 // pred_check_branch
          %1649 = sbr.rel (%p1647) target = $region52
        $region51: #{tpu_custom_call.1} parent=31 // pred_region
          %v1650 = vld [vmem:[#allocation2] sm:$0xff]
          %v1651 = vld [vmem:[#allocation8] sm:$0x1]
          %v1653 = vlaneseq
          %v1654 = vshrl.u32 %v1653, 7
          %v1655 = vsub.s32 0, %v1654
          %v1656 = vrot.slane %v1651, %v1655
          %v1658 = vadd.f32 %v1650, %v1656
          %v1659 = vmax.f32 %v1658, 0.0
          %1660 = vst [vmem:[#allocation9] sm:$0xff] %v1659
        $region52: #{tpu_custom_call.1} parent=31 // pred_fallthru
          _
        // Predicated region
        $region53: #{tpu_custom_call.1} parent=31 // pred_check
          %p1661 = pneg %p107
        $region54: #{tpu_custom_call.1} parent=31 // pred_check_branch
          %1663 = sbr.rel (%p1661) target = $region56
        $region55: #{tpu_custom_call.1} parent=31 // pred_region
          %s1665 = ssub.s32 128, 128
          %1666 = vsyncadd [#allocation5], %s1665
          %s1668 = sshll.u32 [#allocation9], 4
          %s1669 = int_to_ptr.vmem [resolvable:$true] %s1668
          %1671 = dma.vmem_to_hbm [thread:$0]  %s1669, 128, %s3, [#allocation5]
        $region56: #{tpu_custom_call.1} parent=31 // pred_fallthru
          _
        // Predicated region
        $region57: #{tpu_custom_call.1} parent=31 // pred_check
          %p1672 = pneg %p107
        $region58: #{tpu_custom_call.1} parent=31 // pred_check_branch
          %1674 = sbr.rel (%p1672) target = $region60
        $region59: #{tpu_custom_call.1} parent=31 // pred_region
          %1675 = dma.done [#allocation5], 128
        $region60: #{tpu_custom_call.1} parent=31 // pred_fallthru
          _
      $region32: #{tpu_custom_call.1} parent=5 // pred_fallthru
        _
      %p1676 = scmp.le.s32.totalorder 2, %s16
      // Predicated region
      $region61: #{tpu_custom_call.1} parent=5 // pred_check
        %p1677 = pneg %p1676
      $region62: #{tpu_custom_call.1} parent=5 // pred_check_branch
        %1679 = sbr.rel (%p1677) target = $region64
      $region63: #{tpu_custom_call.1} parent=5 // pred_region
        %s1680 = ssub.s32 %s16, 2
      $region64: #{tpu_custom_call.1} parent=5 // pred_fallthru
        _
    $region6: #{tpu_custom_call.1} parent=1 // loop_footer
      %s20 = sadd.s32 1, %s16
    $region7: #{tpu_custom_call.1} parent=1 // loop_footer_branch
      %15 = sbr.rel target = $region3
    $region8: #{tpu_custom_call.1} parent=1 // loop_exit
      _
    %1681 = vsyncpa [#allocation4], 1
    %s1682 = scalar_lea.sflag [#allocation4], 1
    %1683 = vsyncpa %s1682, 1
    %1684 = vsyncpa [#allocation7], 1
    %s1685 = scalar_lea.sflag [#allocation7], 1
    %1686 = vsyncpa %s1685, 1
    %1687 = vsyncpa [#allocation5], 1
    %s1688 = scalar_lea.sflag [#allocation5], 1
    %1689 = vsyncpa %s1688, 1

</llo_original>
